<compile_context>
chip_gen: v7x
topology: tpu7x:2x2x1
jax: 0.10.0
libtpu: 0.0.40
codegen_flags: <defaults>
</compile_context>

<pallas_src>
import functools

import jax
import jax.numpy as jnp
from jax.experimental import pallas as pl
from jax.experimental.pallas import tpu as pltpu

# ---- module config (mirrors GAT2.__init__ / args) ----
NUM_HEADS = 2
LEAKY_ALPHA = 0.2          # gat_leakerelu_alpha
ALPHA_TELEPORT = 0.5       # gnn_alpha_teleport
RESIDUAL = True            # gnn_residual_connection (requires D_out == D_in)
NEG_INF = -9e15


def _elu(x):
    return jnp.where(x > 0, x, jnp.exp(x) - 1.0)


def _leaky_relu(x):
    return jnp.where(x > 0, x, LEAKY_ALPHA * x)


def _pairwise_sum(f_src, f_dst, ones_col):
    """e[i, j] = f_src[i, 0] + f_dst[j, 0].

    Built as a K=2 matmul on the MXU (contract on the trailing axis of both
    operands) instead of a sublane->lane transpose: avoids an XLU relayout.
    `ones_col` is hoisted by the caller and reused across heads/layers.
    """
    lhs = jnp.concatenate([f_src, ones_col], axis=-1)   # (R, 2): [f_src, 1]
    rhs = jnp.concatenate([ones_col, f_dst], axis=-1)   # (R, 2): [1, f_dst]
    return jnp.einsum("ik,jk->ij", lhs, rhs, preferred_element_type=jnp.float32)


def _masked_softmax_rows(e, bias):
    e = e + bias                                  # bias: 0 intra-graph edge, -9e15 otherwise
    m = jnp.max(e, axis=-1, keepdims=True)
    p = jnp.exp(e - m)
    s = jnp.sum(p, axis=-1, keepdims=True)
    # Exact reciprocal (review correctness note): attention rows sum to 1;
    # the divide is nowhere near the bottleneck at these shapes.
    return p / s


def gat2_kernel(x_ref, bias_ref, w1_ref, wa1_ref, w2_ref, wa2_ref, out_ref):
    r, d_in = x_ref.shape                         # R = TB*N block-diagonalized rows
    nh = wa1_ref.shape[1] // 2
    hid = w1_ref.shape[1] // nh

    x = x_ref[...]                                # (R, D_in)
    bias = bias_ref[...]                          # (R, R) additive block-diag mask
    ones_col = jnp.ones((r, 1), jnp.float32)      # hoisted: built once, reused 3x

    # ---- first GAT layer: all heads fused into two full-lane matmuls ----
    wh1 = jnp.dot(x, w1_ref[...], preferred_element_type=jnp.float32)    # (R, nh*H)
    f1 = jnp.dot(x, wa1_ref[...], preferred_element_type=jnp.float32)    # (R, 2*nh)

    head_outs = []
    for h in range(nh):                           # nh is small & static
        f_src = f1[:, 2 * h:2 * h + 1]            # (R, 1)
        f_dst = f1[:, 2 * h + 1:2 * h + 2]        # (R, 1)
        e = _leaky_relu(_pairwise_sum(f_src, f_dst, ones_col))           # (R, R)
        att = _masked_softmax_rows(e, bias)                              # (R, R)
        wh_h = wh1[:, h * hid:(h + 1) * hid]                             # (R, H)
        head_outs.append(jnp.dot(att, wh_h, preferred_element_type=jnp.float32))
    h_cat = head_outs[0] if nh == 1 else jnp.concatenate(head_outs, axis=-1)
    # per-head elu (concat=True) followed by the F.elu in GAT2.forward, fused
    # into one select: elu(elu(x)) = x if x > 0 else exp(exp(x) - 1) - 1.
    h_cat = jnp.where(h_cat > 0, h_cat, jnp.exp(jnp.exp(h_cat) - 1.0) - 1.0)

    # ---- output attention layer (concat=False -> no elu) ----
    wh2 = jnp.dot(h_cat, w2_ref[...], preferred_element_type=jnp.float32)   # (R, D_out)
    f2 = jnp.dot(h_cat, wa2_ref[...], preferred_element_type=jnp.float32)   # (R, 2)
    e2 = _leaky_relu(_pairwise_sum(f2[:, 0:1], f2[:, 1:2], ones_col))
    att2 = _masked_softmax_rows(e2, bias)
    out = jnp.dot(att2, wh2, preferred_element_type=jnp.float32)            # (R, D_out)

    if RESIDUAL:
        out = out + x * jnp.float32(ALPHA_TELEPORT)

    # norm (graph_norm_type=None) -> identity
    # NOTE: D_out=8 -> masked 8-lane stores; a lane-dense (TB, N*D_out) repack
    # would require a sublane->lane relayout that costs more than it saves here.
    out_ref[...] = out


def _pick_graphs_per_step(B, N, target_rows, min_grid_steps):
    """Largest divisor of B (no batch padding) whose row block fits target_rows."""
    cands = [t for t in range(1, B + 1)
             if B % t == 0                        # no jnp.pad over x/adj
             and B // t >= min_grid_steps         # grid-length floor (v7x: 2 TCs)
             and t * N <= target_rows             # MXU-sized row block
             and ((t * N) % 8 == 0 or t == B)]    # (8,128) sublane rule (full dim exempt)
    return max(cands) if cands else B             # fallback: one full-batch block


@functools.partial(jax.jit, static_argnames=("target_rows", "min_grid_steps"))
def gat2_forward(x, adj, w1, a1_src, a1_dst, w2, a2_src, a2_dst,
                 *, target_rows=256, min_grid_steps=1):
    # target_rows: aim TB*N at the MXU width (256 on v6e/v7x; 128 is enough on
    # v5e's 128x128 MXU).  min_grid_steps=2 on v7x keeps both TensorCores busy;
    # 1 (grid-minimal) is optimal on single-TC v5e/v6e.
    B, N, D_in = x.shape
    nh, _, H = w1.shape
    D_out = w2.shape[1]
    if RESIDUAL:
        assert D_out == D_in, (
            f"residual connection requires dim_out == dim_in ({D_out} vs {D_in})")

    # ---- fold weights (runs under the same jit as the kernel -> fuses) ------
    # fused first-layer weight: columns [head0 | head1 | ...]
    w1_all = jnp.transpose(w1, (1, 0, 2)).reshape(D_in, nh * H)
    # pre-fold attention vectors:  x @ (W @ a)  ==  (x @ W) @ a
    wsrc = jnp.einsum("hdk,hko->hdo", w1, a1_src)            # (nh, D_in, 1)
    wdst = jnp.einsum("hdk,hko->hdo", w1, a1_dst)            # (nh, D_in, 1)
    wa1 = jnp.transpose(jnp.concatenate([wsrc, wdst], axis=-1),
                        (1, 0, 2)).reshape(D_in, 2 * nh)     # cols: s0,d0,s1,d1,...
    wa2 = jnp.concatenate([w2 @ a2_src, w2 @ a2_dst], axis=-1)   # (nh*H, 2)

    # ---- graphs-per-step (TB) and block-diagonal row count R ----------------
    tb = _pick_graphs_per_step(B, N, target_rows, min_grid_steps)
    g = B // tb
    R = tb * N
    # VMEM per step ~ 2 bufs x (R*R + R*D_in + R*D_out) x 4 B + weights:
    # ~150 KiB at R=128 -- far under the 32 MiB default scoped limit on every
    # generation (v7x's 64 MiB physical included); no vmem_limit override needed.

    # ---- block-diagonal additive mask bias (built once, outside the kernel) --
    # bias_bd[g, i*N+p, j*N+q] = 0 if (i == j and adj[g*tb+i, p, q] > 0) else -9e15
    bias = jnp.where(adj > 0, jnp.float32(0.0), jnp.float32(NEG_INF))    # (B, N, N)
    bias = bias.reshape(g, tb, N, N)
    eye = jnp.eye(tb, dtype=jnp.bool_)
    bias_bd = jnp.where(eye[None, :, None, :, None],
                        bias[:, :, :, None, :],
                        jnp.float32(NEG_INF))                # (g, tb, N, tb, N)
    bias_bd = bias_bd.reshape(g * R, R)

    x2d = x.reshape(B * N, D_in)                             # layout-preserving

    out2d = pl.pallas_call(
        gat2_kernel,
        out_shape=jax.ShapeDtypeStruct((B * N, D_out), jnp.float32),
        grid_spec=pltpu.PrefetchScalarGridSpec(
            num_scalar_prefetch=0,
            grid=(g,),
            in_specs=[
                pl.BlockSpec((R, D_in), lambda b: (b, 0)),        # x rows
                pl.BlockSpec((R, R), lambda b: (b, 0)),           # block-diag bias
                # Constant-index weights: pl.Buffered(1) would halve their VMEM
                # reservation but saves <4 KiB here and pipeline_mode support in
                # grid-based pallas_call is version-sensitive -- skipped.
                pl.BlockSpec((D_in, nh * H), lambda b: (0, 0)),   # fused W1
                pl.BlockSpec((D_in, 2 * nh), lambda b: (0, 0)),   # fused W1@a1
                pl.BlockSpec((nh * H, D_out), lambda b: (0, 0)),  # W2
                pl.BlockSpec((nh * H, 2), lambda b: (0, 0)),      # fused W2@a2
            ],
            out_specs=pl.BlockSpec((R, D_out), lambda b: (b, 0)),
        ),
        compiler_params=pltpu.CompilerParams(
            dimension_semantics=("parallel",)),   # batch groups shard across TCs (v7x)
    )(x2d, bias_bd, w1_all, wa1, w2, wa2)
    return out2d.reshape(B, N, D_out)


def gat2_reference(x, adj, w1, a1_src, a1_dst, w2, a2_src, a2_dst):
    """Pure-JAX reference of the same forward pass (unfused, for correctness)."""
    def layer(h, W, a_s, a_d):
        Wh = jnp.einsum("bnd,df->bnf", h, W)
        f1 = jnp.einsum("bnf,fo->bno", Wh, a_s)
        f2 = jnp.einsum("bnf,fo->bno", Wh, a_d)
        e = f1 + jnp.swapaxes(f2, -1, -2)
        e = jnp.where(e > 0, e, LEAKY_ALPHA * e)
        e = jnp.where(adj > 0, e, NEG_INF)
        att = jax.nn.softmax(e, axis=-1)
        return jnp.einsum("bnm,bmf->bnf", att, Wh)

    heads = [_elu(layer(x, w1[h], a1_src[h], a1_dst[h]))
             for h in range(w1.shape[0])]
    h_cat = _elu(jnp.concatenate(heads, axis=-1))
    out = layer(h_cat, w2, a2_src, a2_dst)
    if RESIDUAL:
        out = out + x * ALPHA_TELEPORT
    return out


if __name__ == "__main__":
    # batch=8 graphs, num_nodes=16, dim_in=8, dim_hidden=32, dim_out=8
    # (dim_out == dim_in so the residual path runs).  With the default
    # target_rows, all 8 graphs pack into one R = 128-row block (grid=1 --
    # optimal for single-TC v5e/v6e; pass min_grid_steps=2 on v7x).
    B, N, D_IN, D_HID, D_OUT = 8, 16, 8, 32, 8

    key = jax.random.PRNGKey(0)
    kx, kadj, k1, k2, k3, k4 = jax.random.split(key, 6)

    x = jax.random.normal(kx, (B, N, D_IN), dtype=jnp.float32)
    # binary adjacency with self-loops
    adj = (jax.random.uniform(kadj, (B, N, N)) > 0.5).astype(jnp.float32)
    adj = jnp.maximum(adj, jnp.eye(N, dtype=jnp.float32)[None])

    def xavier(k, shape):
        fan_in, fan_out = shape[-2], shape[-1]
        bound = 1.414 * (6.0 / (fan_in + fan_out)) ** 0.5  # gain=1.414 (pyGAT init)
        return jax.random.uniform(k, shape, jnp.float32, -bound, bound)

    # first GAT layer parameters, one set per head
    w1 = xavier(k1, (NUM_HEADS, D_IN, D_HID))
    a1 = xavier(k2, (NUM_HEADS, 2 * D_HID, 1))
    a1_src, a1_dst = a1[:, :D_HID, :], a1[:, D_HID:, :]
    # output GAT layer parameters
    w2 = xavier(k3, (NUM_HEADS * D_HID, D_OUT))
    a2 = xavier(k4, (2 * D_OUT, 1))
    a2_src, a2_dst = a2[:D_OUT, :], a2[D_OUT:, :]

    out = gat2_forward(x, adj, w1, a1_src, a1_dst, w2, a2_src, a2_dst)
    out = jax.block_until_ready(out)
    assert out.shape == (B, N, D_OUT)
    assert bool(jnp.all(jnp.isfinite(out))), "non-finite output"

    ref = gat2_reference(x, adj, w1, a1_src, a1_dst, w2, a2_src, a2_dst)
    # Exact softmax reciprocal -> only the f32 W@a pre-folding differs from the
    # reference; real bugs are orders larger than this tolerance.
    err = float(jnp.max(jnp.abs(out - ref)))
    assert jnp.allclose(out, ref, atol=2e-3, rtol=2e-3), \
        f"mismatch vs reference, max abs err = {err}"

    print("KERNEL_OK")
</pallas_src>

<mosaic_0001>
module attributes {stable_mosaic.version = 11 : i64} {
  func.func @gat2_kernel(%arg0: i32, %arg1: memref<128x8xf32, #tpu.memory_space<vmem>>, %arg2: memref<128x128xf32, #tpu.memory_space<vmem>>, %arg3: memref<8x64xf32, #tpu.memory_space<vmem>>, %arg4: memref<8x4xf32, #tpu.memory_space<vmem>>, %arg5: memref<64x8xf32, #tpu.memory_space<vmem>>, %arg6: memref<64x2xf32, #tpu.memory_space<vmem>>, %arg7: memref<128x8xf32, #tpu.memory_space<vmem>>) attributes {dimension_semantics = [#tpu.dimension_semantics<parallel>], iteration_bounds = array<i64: 1>, scalar_prefetch = 0 : i64, scratch_operands = 0 : i64, tpu.core_type = #tpu.core_type<tc>, window_params = [{transform_indices = @transform_0, window_bounds = array<i64: 128, 8>}, {transform_indices = @transform_1, window_bounds = array<i64: 128, 128>}, {pipeline_mode = #tpu.pipeline_mode<synchronous>, transform_indices = @transform_2, window_bounds = array<i64: 8, 64>}, {pipeline_mode = #tpu.pipeline_mode<synchronous>, transform_indices = @transform_3, window_bounds = array<i64: 8, 4>}, {pipeline_mode = #tpu.pipeline_mode<synchronous>, transform_indices = @transform_4, window_bounds = array<i64: 64, 8>}, {pipeline_mode = #tpu.pipeline_mode<synchronous>, transform_indices = @transform_5, window_bounds = array<i64: 64, 2>}, {transform_indices = @transform_6, window_bounds = array<i64: 128, 8>}]} {
    %c0 = arith.constant 0 : index
    %c0_0 = arith.constant 0 : index
    %0 = vector.load %arg1[%c0, %c0_0] : memref<128x8xf32, #tpu.memory_space<vmem>>, vector<128x8xf32>
    %c0_1 = arith.constant 0 : index
    %c0_2 = arith.constant 0 : index
    %1 = vector.load %arg2[%c0_1, %c0_2] : memref<128x128xf32, #tpu.memory_space<vmem>>, vector<128x128xf32>
    %cst = arith.constant 1.000000e+00 : f32
    %2 = vector.broadcast %cst : f32 to vector<128x1xf32>
    %c0_3 = arith.constant 0 : index
    %c0_4 = arith.constant 0 : index
    %3 = vector.load %arg3[%c0_3, %c0_4] : memref<8x64xf32, #tpu.memory_space<vmem>>, vector<8x64xf32>
    %cst_5 = arith.constant dense<0.000000e+00> : vector<128x64xf32>
    %4 = tpu.matmul %0, %3, %cst_5 {dimension_numbers = #tpu.dot_dimension_numbers<[1], [0], [0], [1], [0, 0, 1, 1], [], []>} : vector<128x8xf32>, vector<8x64xf32>, vector<128x64xf32> -> vector<128x64xf32>
    %c0_6 = arith.constant 0 : index
    %c0_7 = arith.constant 0 : index
    %5 = vector.load %arg4[%c0_6, %c0_7] : memref<8x4xf32, #tpu.memory_space<vmem>>, vector<8x4xf32>
    %cst_8 = arith.constant dense<0.000000e+00> : vector<128x4xf32>
    %6 = tpu.matmul %0, %5, %cst_8 {dimension_numbers = #tpu.dot_dimension_numbers<[1], [0], [0], [1], [0, 0, 1, 1], [], []>} : vector<128x8xf32>, vector<8x4xf32>, vector<128x4xf32> -> vector<128x4xf32>
    %7 = vector.extract_strided_slice %6 {offsets = [0, 0], sizes = [128, 1], strides = [1, 1]} : vector<128x4xf32> to vector<128x1xf32>
    %8 = vector.extract_strided_slice %6 {offsets = [0, 1], sizes = [128, 1], strides = [1, 1]} : vector<128x4xf32> to vector<128x1xf32>
    %9 = tpu.concatenate %7, %2 in 1 : vector<128x1xf32>, vector<128x1xf32> -> vector<128x2xf32>
    %10 = tpu.concatenate %2, %8 in 1 : vector<128x1xf32>, vector<128x1xf32> -> vector<128x2xf32>
    "tpu.trace_start"() <{level = 10 : i32, message = "ik,jk->ij"}> : () -> ()
    %cst_9 = arith.constant dense<0.000000e+00> : vector<128x128xf32>
    %11 = tpu.matmul %9, %10, %cst_9 {dimension_numbers = #tpu.dot_dimension_numbers<[1], [1], [0], [0], [0, 0, 1, 0], [], []>} : vector<128x2xf32>, vector<128x2xf32>, vector<128x128xf32> -> vector<128x128xf32>
    %cst_10 = arith.constant 0.000000e+00 : f32
    "tpu.trace_stop"() : () -> ()
    %12 = vector.broadcast %cst_10 : f32 to vector<128x128xf32>
    %13 = arith.cmpf ogt, %11, %12 : vector<128x128xf32>
    %cst_11 = arith.constant 2.000000e-01 : f32
    %14 = vector.broadcast %cst_11 : f32 to vector<128x128xf32>
    %15 = arith.mulf %14, %11 : vector<128x128xf32>
    %16 = arith.select %13, %11, %15 : vector<128x128xi1>, vector<128x128xf32>
    %17 = arith.addf %16, %1 : vector<128x128xf32>
    %cst_12 = arith.constant dense<0xFF800000> : vector<128xf32>
    %18 = vector.multi_reduction <maximumf>, %17, %cst_12 [1] : vector<128x128xf32> to vector<128xf32>
    %19 = vector.shape_cast %18 : vector<128xf32> to vector<128x1xf32>
    %20 = vector.broadcast %19 : vector<128x1xf32> to vector<128x128xf32>
    %21 = arith.subf %17, %20 : vector<128x128xf32>
    %22 = math.exp %21 : vector<128x128xf32>
    %cst_13 = arith.constant dense<0.000000e+00> : vector<128xf32>
    %23 = vector.multi_reduction <add>, %22, %cst_13 [1] : vector<128x128xf32> to vector<128xf32>
    %24 = vector.shape_cast %23 : vector<128xf32> to vector<128x1xf32>
    %25 = vector.broadcast %24 : vector<128x1xf32> to vector<128x128xf32>
    %26 = arith.divf %22, %25 : vector<128x128xf32>
    %27 = vector.extract_strided_slice %4 {offsets = [0, 0], sizes = [128, 32], strides = [1, 1]} : vector<128x64xf32> to vector<128x32xf32>
    %cst_14 = arith.constant dense<0.000000e+00> : vector<128x32xf32>
    %28 = tpu.matmul %26, %27, %cst_14 {dimension_numbers = #tpu.dot_dimension_numbers<[1], [0], [0], [1], [0, 0, 1, 1], [], []>} : vector<128x128xf32>, vector<128x32xf32>, vector<128x32xf32> -> vector<128x32xf32>
    %29 = vector.extract_strided_slice %6 {offsets = [0, 2], sizes = [128, 1], strides = [1, 1]} : vector<128x4xf32> to vector<128x1xf32>
    %30 = vector.extract_strided_slice %6 {offsets = [0, 3], sizes = [128, 1], strides = [1, 1]} : vector<128x4xf32> to vector<128x1xf32>
    %31 = tpu.concatenate %29, %2 in 1 : vector<128x1xf32>, vector<128x1xf32> -> vector<128x2xf32>
    %32 = tpu.concatenate %2, %30 in 1 : vector<128x1xf32>, vector<128x1xf32> -> vector<128x2xf32>
    "tpu.trace_start"() <{level = 10 : i32, message = "ik,jk->ij"}> : () -> ()
    %cst_15 = arith.constant dense<0.000000e+00> : vector<128x128xf32>
    %33 = tpu.matmul %31, %32, %cst_15 {dimension_numbers = #tpu.dot_dimension_numbers<[1], [1], [0], [0], [0, 0, 1, 0], [], []>} : vector<128x2xf32>, vector<128x2xf32>, vector<128x128xf32> -> vector<128x128xf32>
    %cst_16 = arith.constant 0.000000e+00 : f32
    "tpu.trace_stop"() : () -> ()
    %34 = vector.broadcast %cst_16 : f32 to vector<128x128xf32>
    %35 = arith.cmpf ogt, %33, %34 : vector<128x128xf32>
    %cst_17 = arith.constant 2.000000e-01 : f32
    %36 = vector.broadcast %cst_17 : f32 to vector<128x128xf32>
    %37 = arith.mulf %36, %33 : vector<128x128xf32>
    %38 = arith.select %35, %33, %37 : vector<128x128xi1>, vector<128x128xf32>
    %39 = arith.addf %38, %1 : vector<128x128xf32>
    %cst_18 = arith.constant dense<0xFF800000> : vector<128xf32>
    %40 = vector.multi_reduction <maximumf>, %39, %cst_18 [1] : vector<128x128xf32> to vector<128xf32>
    %41 = vector.shape_cast %40 : vector<128xf32> to vector<128x1xf32>
    %42 = vector.broadcast %41 : vector<128x1xf32> to vector<128x128xf32>
    %43 = arith.subf %39, %42 : vector<128x128xf32>
    %44 = math.exp %43 : vector<128x128xf32>
    %cst_19 = arith.constant dense<0.000000e+00> : vector<128xf32>
    %45 = vector.multi_reduction <add>, %44, %cst_19 [1] : vector<128x128xf32> to vector<128xf32>
    %46 = vector.shape_cast %45 : vector<128xf32> to vector<128x1xf32>
    %47 = vector.broadcast %46 : vector<128x1xf32> to vector<128x128xf32>
    %48 = arith.divf %44, %47 : vector<128x128xf32>
    %49 = vector.extract_strided_slice %4 {offsets = [0, 32], sizes = [128, 32], strides = [1, 1]} : vector<128x64xf32> to vector<128x32xf32>
    %cst_20 = arith.constant dense<0.000000e+00> : vector<128x32xf32>
    %50 = tpu.matmul %48, %49, %cst_20 {dimension_numbers = #tpu.dot_dimension_numbers<[1], [0], [0], [1], [0, 0, 1, 1], [], []>} : vector<128x128xf32>, vector<128x32xf32>, vector<128x32xf32> -> vector<128x32xf32>
    %51 = tpu.concatenate %28, %50 in 1 : vector<128x32xf32>, vector<128x32xf32> -> vector<128x64xf32>
    %cst_21 = arith.constant 0.000000e+00 : f32
    %52 = vector.broadcast %cst_21 : f32 to vector<128x64xf32>
    %53 = arith.cmpf ogt, %51, %52 : vector<128x64xf32>
    %54 = math.exp %51 : vector<128x64xf32>
    %cst_22 = arith.constant 1.000000e+00 : f32
    %55 = vector.broadcast %cst_22 : f32 to vector<128x64xf32>
    %56 = arith.subf %54, %55 : vector<128x64xf32>
    %57 = math.exp %56 : vector<128x64xf32>
    %cst_23 = arith.constant 1.000000e+00 : f32
    %58 = vector.broadcast %cst_23 : f32 to vector<128x64xf32>
    %59 = arith.subf %57, %58 : vector<128x64xf32>
    %60 = arith.select %53, %51, %59 : vector<128x64xi1>, vector<128x64xf32>
    %c0_24 = arith.constant 0 : index
    %c0_25 = arith.constant 0 : index
    %61 = vector.load %arg5[%c0_24, %c0_25] : memref<64x8xf32, #tpu.memory_space<vmem>>, vector<64x8xf32>
    %cst_26 = arith.constant dense<0.000000e+00> : vector<128x8xf32>
    %62 = tpu.matmul %60, %61, %cst_26 {dimension_numbers = #tpu.dot_dimension_numbers<[1], [0], [0], [1], [0, 0, 1, 1], [], []>} : vector<128x64xf32>, vector<64x8xf32>, vector<128x8xf32> -> vector<128x8xf32>
    %c0_27 = arith.constant 0 : index
    %c0_28 = arith.constant 0 : index
    %63 = vector.load %arg6[%c0_27, %c0_28] : memref<64x2xf32, #tpu.memory_space<vmem>>, vector<64x2xf32>
    %cst_29 = arith.constant dense<0.000000e+00> : vector<128x2xf32>
    %64 = tpu.matmul %60, %63, %cst_29 {dimension_numbers = #tpu.dot_dimension_numbers<[1], [0], [0], [1], [0, 0, 1, 1], [], []>} : vector<128x64xf32>, vector<64x2xf32>, vector<128x2xf32> -> vector<128x2xf32>
    %65 = vector.extract_strided_slice %64 {offsets = [0, 0], sizes = [128, 1], strides = [1, 1]} : vector<128x2xf32> to vector<128x1xf32>
    %66 = vector.extract_strided_slice %64 {offsets = [0, 1], sizes = [128, 1], strides = [1, 1]} : vector<128x2xf32> to vector<128x1xf32>
    %67 = tpu.concatenate %65, %2 in 1 : vector<128x1xf32>, vector<128x1xf32> -> vector<128x2xf32>
    %68 = tpu.concatenate %2, %66 in 1 : vector<128x1xf32>, vector<128x1xf32> -> vector<128x2xf32>
    "tpu.trace_start"() <{level = 10 : i32, message = "ik,jk->ij"}> : () -> ()
    %cst_30 = arith.constant dense<0.000000e+00> : vector<128x128xf32>
    %69 = tpu.matmul %67, %68, %cst_30 {dimension_numbers = #tpu.dot_dimension_numbers<[1], [1], [0], [0], [0, 0, 1, 0], [], []>} : vector<128x2xf32>, vector<128x2xf32>, vector<128x128xf32> -> vector<128x128xf32>
    %cst_31 = arith.constant 0.000000e+00 : f32
    "tpu.trace_stop"() : () -> ()
    %70 = vector.broadcast %cst_31 : f32 to vector<128x128xf32>
    %71 = arith.cmpf ogt, %69, %70 : vector<128x128xf32>
    %cst_32 = arith.constant 2.000000e-01 : f32
    %72 = vector.broadcast %cst_32 : f32 to vector<128x128xf32>
    %73 = arith.mulf %72, %69 : vector<128x128xf32>
    %74 = arith.select %71, %69, %73 : vector<128x128xi1>, vector<128x128xf32>
    %75 = arith.addf %74, %1 : vector<128x128xf32>
    %cst_33 = arith.constant dense<0xFF800000> : vector<128xf32>
    %76 = vector.multi_reduction <maximumf>, %75, %cst_33 [1] : vector<128x128xf32> to vector<128xf32>
    %77 = vector.shape_cast %76 : vector<128xf32> to vector<128x1xf32>
    %78 = vector.broadcast %77 : vector<128x1xf32> to vector<128x128xf32>
    %79 = arith.subf %75, %78 : vector<128x128xf32>
    %80 = math.exp %79 : vector<128x128xf32>
    %cst_34 = arith.constant dense<0.000000e+00> : vector<128xf32>
    %81 = vector.multi_reduction <add>, %80, %cst_34 [1] : vector<128x128xf32> to vector<128xf32>
    %82 = vector.shape_cast %81 : vector<128xf32> to vector<128x1xf32>
    %83 = vector.broadcast %82 : vector<128x1xf32> to vector<128x128xf32>
    %84 = arith.divf %80, %83 : vector<128x128xf32>
    %cst_35 = arith.constant dense<0.000000e+00> : vector<128x8xf32>
    %85 = tpu.matmul %84, %62, %cst_35 {dimension_numbers = #tpu.dot_dimension_numbers<[1], [0], [0], [1], [0, 0, 1, 1], [], []>} : vector<128x128xf32>, vector<128x8xf32>, vector<128x8xf32> -> vector<128x8xf32>
    %cst_36 = arith.constant 5.000000e-01 : f32
    %86 = vector.broadcast %cst_36 : f32 to vector<128x8xf32>
    %87 = arith.mulf %0, %86 : vector<128x8xf32>
    %88 = arith.addf %85, %87 : vector<128x8xf32>
    %c0_37 = arith.constant 0 : index
    %c0_38 = arith.constant 0 : index
    %89 = vector.load %arg7[%c0_37, %c0_38] : memref<128x8xf32, #tpu.memory_space<vmem>>, vector<128x8xf32>
    tpu.vector_store %arg7[%c0_37, %c0_38], %88 {strides = array<i32>} : memref<128x8xf32, #tpu.memory_space<vmem>>, vector<128x8xf32>,
    return
  }
  func.func @transform_0(%arg0: i32) -> (i32, i32) {
    %c0_i32 = arith.constant 0 : i32
    %c0_i32_0 = arith.constant 0 : i32
    return %arg0, %c0_i32 : i32, i32
  }
  func.func @transform_1(%arg0: i32) -> (i32, i32) {
    %c0_i32 = arith.constant 0 : i32
    %c0_i32_0 = arith.constant 0 : i32
    return %arg0, %c0_i32 : i32, i32
  }
  func.func @transform_2(%arg0: i32) -> (i32, i32) {
    %c0_i32 = arith.constant 0 : i32
    %c0_i32_0 = arith.constant 0 : i32
    %c0_i32_1 = arith.constant 0 : i32
    return %c0_i32, %c0_i32_0 : i32, i32
  }
  func.func @transform_3(%arg0: i32) -> (i32, i32) {
    %c0_i32 = arith.constant 0 : i32
    %c0_i32_0 = arith.constant 0 : i32
    %c0_i32_1 = arith.constant 0 : i32
    return %c0_i32, %c0_i32_0 : i32, i32
  }
  func.func @transform_4(%arg0: i32) -> (i32, i32) {
    %c0_i32 = arith.constant 0 : i32
    %c0_i32_0 = arith.constant 0 : i32
    %c0_i32_1 = arith.constant 0 : i32
    return %c0_i32, %c0_i32_0 : i32, i32
  }
  func.func @transform_5(%arg0: i32) -> (i32, i32) {
    %c0_i32 = arith.constant 0 : i32
    %c0_i32_0 = arith.constant 0 : i32
    %c0_i32_1 = arith.constant 0 : i32
    return %c0_i32, %c0_i32_0 : i32, i32
  }
  func.func @transform_6(%arg0: i32) -> (i32, i32) {
    %c0_i32 = arith.constant 0 : i32
    %c0_i32_0 = arith.constant 0 : i32
    return %arg0, %c0_i32 : i32, i32
  }
}

</mosaic_0001>

<llo_original>
// kernel: gat2_forward.1
$region0: #{gat2_forward.1}
  #allocation0 [shape = 'u32[]', space=smem, size = 0x4, offset = 0x4, fixed_abs, tag = 'smem constant byte address 0x4 - core index']
  #allocation1 [shape = 'u32[144,128]{1,0:T(1,128)}', space=vmem, size = 0x12000, scoped, tag = 'internal scratch']
  %s0 = inlined_call_operand.vmem [shape: f32[128,8], index: 0, kind: input, shape index: {}]
  %s1 = inlined_call_operand.vmem [shape: f32[128,128], index: 1, kind: input, shape index: {}]
  %s2 = inlined_call_operand.vmem [shape: f32[8,64], index: 2, kind: input, shape index: {}]
  %s3 = inlined_call_operand.vmem [shape: f32[8,4], index: 3, kind: input, shape index: {}]
  %s4 = inlined_call_operand.vmem [shape: f32[64,8], index: 4, kind: input, shape index: {}]
  %s5 = inlined_call_operand.vmem [shape: f32[64,2], index: 5, kind: input, shape index: {}]
  %s6 = inlined_call_operand.vmem [shape: f32[128,8], index: 6, kind: output, shape index: {}]
  %s7 = sld [smem:[#allocation0]]
  $region34: #{gat2_forward.1} parent=0
    _
  %s9 = ssub.s32 1, %s7
  %s10 = scalar_select 0, %s9, %s7
  // Predicated region
  $region2: #{gat2_forward.1} parent=0 // pred_check
    _
  $region3: #{gat2_forward.1} parent=0 // pred_check_branch
    %12 = sbr.rel (0) target = $region5
  $region4: #{gat2_forward.1} parent=0 // pred_region
    _
  $region5: #{gat2_forward.1} parent=0 // pred_fallthru
    _
  // Predicated region
  $region6: #{gat2_forward.1} parent=0 // pred_check
    _
  $region7: #{gat2_forward.1} parent=0 // pred_check_branch
    %14 = sbr.rel (0) target = $region9
  $region8: #{gat2_forward.1} parent=0 // pred_region
    _
  $region9: #{gat2_forward.1} parent=0 // pred_fallthru
    _
  // Predicated region
  $region10: #{gat2_forward.1} parent=0 // pred_check
    _
  $region11: #{gat2_forward.1} parent=0 // pred_check_branch
    %16 = sbr.rel (0) target = $region13
  $region12: #{gat2_forward.1} parent=0 // pred_region
    _
  $region13: #{gat2_forward.1} parent=0 // pred_fallthru
    _
  // Predicated region
  $region14: #{gat2_forward.1} parent=0 // pred_check
    _
  $region15: #{gat2_forward.1} parent=0 // pred_check_branch
    %18 = sbr.rel (0) target = $region17
  $region16: #{gat2_forward.1} parent=0 // pred_region
    _
  $region17: #{gat2_forward.1} parent=0 // pred_fallthru
    _
  // Predicated region
  $region18: #{gat2_forward.1} parent=0 // pred_check
    _
  $region19: #{gat2_forward.1} parent=0 // pred_check_branch
    %20 = sbr.rel (0) target = $region21
  $region20: #{gat2_forward.1} parent=0 // pred_region
    _
  $region21: #{gat2_forward.1} parent=0 // pred_fallthru
    _
  // Predicated region
  $region22: #{gat2_forward.1} parent=0 // pred_check
    _
  $region23: #{gat2_forward.1} parent=0 // pred_check_branch
    %22 = sbr.rel (0) target = $region25
  $region24: #{gat2_forward.1} parent=0 // pred_region
    _
  $region25: #{gat2_forward.1} parent=0 // pred_fallthru
    _
  %v23 = vld [vmem:[%s0] sm:$0xff]
  %v24 = vld [vmem:[%s0 + $0x8] sm:$0xff]
  %v25 = vld [vmem:[%s0 + $0x10] sm:$0xff]
  %v26 = vld [vmem:[%s0 + $0x18] sm:$0xff]
  %v27 = vld [vmem:[%s0 + $0x20] sm:$0xff]
  %v28 = vld [vmem:[%s0 + $0x28] sm:$0xff]
  %v29 = vld [vmem:[%s0 + $0x30] sm:$0xff]
  %v30 = vld [vmem:[%s0 + $0x38] sm:$0xff]
  %v31 = vld [vmem:[%s0 + $0x40] sm:$0xff]
  %v32 = vld [vmem:[%s0 + $0x48] sm:$0xff]
  %v33 = vld [vmem:[%s0 + $0x50] sm:$0xff]
  %v34 = vld [vmem:[%s0 + $0x58] sm:$0xff]
  %v35 = vld [vmem:[%s0 + $0x60] sm:$0xff]
  %v36 = vld [vmem:[%s0 + $0x68] sm:$0xff]
  %v37 = vld [vmem:[%s0 + $0x70] sm:$0xff]
  %v38 = vld [vmem:[%s0 + $0x78] sm:$0xff]
  %v39 = vld [vmem:[%s1] sm:$0xff]
  %v40 = vld [vmem:[%s1 + $0x8] sm:$0xff]
  %v41 = vld [vmem:[%s1 + $0x10] sm:$0xff]
  %v42 = vld [vmem:[%s1 + $0x18] sm:$0xff]
  %v43 = vld [vmem:[%s1 + $0x20] sm:$0xff]
  %v44 = vld [vmem:[%s1 + $0x28] sm:$0xff]
  %v45 = vld [vmem:[%s1 + $0x30] sm:$0xff]
  %v46 = vld [vmem:[%s1 + $0x38] sm:$0xff]
  %v47 = vld [vmem:[%s1 + $0x40] sm:$0xff]
  %v48 = vld [vmem:[%s1 + $0x48] sm:$0xff]
  %v49 = vld [vmem:[%s1 + $0x50] sm:$0xff]
  %v50 = vld [vmem:[%s1 + $0x58] sm:$0xff]
  %v51 = vld [vmem:[%s1 + $0x60] sm:$0xff]
  %v52 = vld [vmem:[%s1 + $0x68] sm:$0xff]
  %v53 = vld [vmem:[%s1 + $0x70] sm:$0xff]
  %v54 = vld [vmem:[%s1 + $0x78] sm:$0xff]
  %v55 = vld [vmem:[%s2] sm:$0xff]
  %vm56 = vcmask 64512
  %v58 = vsel %vm56, %v23, 0
  %v61 = vsel %vm56, %v24, 0
  %v64 = vsel %vm56, %v25, 0
  %v67 = vsel %vm56, %v26, 0
  %v70 = vsel %vm56, %v27, 0
  %v73 = vsel %vm56, %v28, 0
  %v76 = vsel %vm56, %v29, 0
  %v79 = vsel %vm56, %v30, 0
  %v82 = vsel %vm56, %v31, 0
  %v85 = vsel %vm56, %v32, 0
  %v88 = vsel %vm56, %v33, 0
  %v91 = vsel %vm56, %v34, 0
  %v94 = vsel %vm56, %v35, 0
  %v97 = vsel %vm56, %v36, 0
  %v100 = vsel %vm56, %v37, 0
  %v103 = vsel %vm56, %v38, 0
  %105 = vmatprep.subr.mxu0 0.0
  %106 = vmatpush1.msra.mxu0 %v55
  %107 = vmatprep.subr.mxu0 0.0
  %108 = vmatpush1.msra.mxu0 0.0
  %109 = vmatprep.subr.mxu0 0.0
  %110 = vmatpush1.msra.mxu0 0.0
  %111 = vmatprep.subr.mxu0 0.0
  %112 = vmatpush1.msra.mxu0 0.0
  %113 = vmatprep.subr.mxu0 0.0
  %114 = vmatpush1.msra.mxu0 0.0
  %115 = vmatprep.subr.mxu0 0.0
  %116 = vmatpush1.msra.mxu0 0.0
  %117 = vmatprep.subr.mxu0 0.0
  %118 = vmatpush1.msra.mxu0 0.0
  %119 = vmatprep.subr.mxu0 0.0
  %120 = vmatpush1.msra.mxu0 0.0
  %121 = vmatprep.subr.mxu0 0.0
  %122 = vmatpush1.msra.mxu0 0.0
  %123 = vmatprep.subr.mxu0 0.0
  %124 = vmatpush1.msra.mxu0 0.0
  %125 = vmatprep.subr.mxu0 0.0
  %126 = vmatpush1.msra.mxu0 0.0
  %127 = vmatprep.subr.mxu0 0.0
  %128 = vmatpush1.msra.mxu0 0.0
  %129 = vmatprep.subr.mxu0 0.0
  %130 = vmatpush1.msra.mxu0 0.0
  %131 = vmatprep.subr.mxu0 0.0
  %132 = vmatpush1.msra.mxu0 0.0
  %133 = vmatprep.subr.mxu0 0.0
  %134 = vmatpush1.msra.mxu0 0.0
  %135 = vmatprep.subr.mxu0 0.0
  %136 = vmatpush1.msra.mxu0 0.0
  %137 = vmatprep.subr.mxu0 0.0
  %138 = vmatpush1.msra.mxu0 0.0
  %139 = vmatprep.subr.mxu0 0.0
  %140 = vmatpush1.msra.mxu0 0.0
  %141 = vmatprep.subr.mxu0 0.0
  %142 = vmatpush1.msra.mxu0 0.0
  %143 = vmatprep.subr.mxu0 0.0
  %144 = vmatpush1.msra.mxu0 0.0
  %145 = vmatprep.subr.mxu0 0.0
  %146 = vmatpush1.msra.mxu0 0.0
  %147 = vmatprep.subr.mxu0 0.0
  %148 = vmatpush1.msra.mxu0 0.0
  %149 = vmatprep.subr.mxu0 0.0
  %150 = vmatpush1.msra.mxu0 0.0
  %151 = vmatprep.subr.mxu0 0.0
  %152 = vmatpush1.msra.mxu0 0.0
  %153 = vmatprep.subr.mxu0 0.0
  %154 = vmatpush1.msra.mxu0 0.0
  %155 = vmatprep.subr.mxu0 0.0
  %156 = vmatpush1.msra.mxu0 0.0
  %157 = vmatprep.subr.mxu0 0.0
  %158 = vmatpush1.msra.mxu0 0.0
  %159 = vmatprep.subr.mxu0 0.0
  %160 = vmatpush1.msra.mxu0 0.0
  %161 = vmatprep.subr.mxu0 0.0
  %162 = vmatpush1.msra.mxu0 0.0
  %163 = vmatprep.subr.mxu0 0.0
  %164 = vmatpush1.msra.mxu0 0.0
  %165 = vmatprep.subr.mxu0 0.0
  %166 = vmatpush1.msra.mxu0 0.0
  %167 = vmatprep.subr.mxu0 0.0
  %168 = vmatpush1.msra.mxu0 0.0
  %169 = vmatprep.mubr.f32.mxu0 0.0
  %170 = vmatmul.mubr.f32.gmra.mrb[0].mxu0 %v58
  %v171 = vpop.f32.mrb[0].mxu0
  %v172 = vadd.f32 0.0, %v171
  %v173 = vpop.f32.mrb[0].mxu0
  %174 = vmatprep.mubr.f32.mxu0 0.0
  %175 = vmatmul.mubr.f32.gmra.mrb[0].mxu0 %v61
  %v176 = vpop.f32.mrb[0].mxu0
  %v177 = vadd.f32 0.0, %v176
  %v178 = vpop.f32.mrb[0].mxu0
  %179 = vmatprep.mubr.f32.mxu0 0.0
  %180 = vmatmul.mubr.f32.gmra.mrb[0].mxu0 %v64
  %v181 = vpop.f32.mrb[0].mxu0
  %v182 = vadd.f32 0.0, %v181
  %v183 = vpop.f32.mrb[0].mxu0
  %184 = vmatprep.mubr.f32.mxu0 0.0
  %185 = vmatmul.mubr.f32.gmra.mrb[0].mxu0 %v67
  %v186 = vpop.f32.mrb[0].mxu0
  %v187 = vadd.f32 0.0, %v186
  %v188 = vpop.f32.mrb[0].mxu0
  %189 = vmatprep.mubr.f32.mxu0 0.0
  %190 = vmatmul.mubr.f32.gmra.mrb[0].mxu0 %v70
  %v191 = vpop.f32.mrb[0].mxu0
  %v192 = vadd.f32 0.0, %v191
  %v193 = vpop.f32.mrb[0].mxu0
  %194 = vmatprep.mubr.f32.mxu0 0.0
  %195 = vmatmul.mubr.f32.gmra.mrb[0].mxu0 %v73
  %v196 = vpop.f32.mrb[0].mxu0
  %v197 = vadd.f32 0.0, %v196
  %v198 = vpop.f32.mrb[0].mxu0
  %199 = vmatprep.mubr.f32.mxu0 0.0
  %200 = vmatmul.mubr.f32.gmra.mrb[0].mxu0 %v76
  %v201 = vpop.f32.mrb[0].mxu0
  %v202 = vadd.f32 0.0, %v201
  %v203 = vpop.f32.mrb[0].mxu0
  %204 = vmatprep.mubr.f32.mxu0 0.0
  %205 = vmatmul.mubr.f32.gmra.mrb[0].mxu0 %v79
  %v206 = vpop.f32.mrb[0].mxu0
  %v207 = vadd.f32 0.0, %v206
  %v208 = vpop.f32.mrb[0].mxu0
  %209 = vmatprep.mubr.f32.mxu0 0.0
  %210 = vmatmul.mubr.f32.gmra.mrb[0].mxu0 %v82
  %v211 = vpop.f32.mrb[0].mxu0
  %v212 = vadd.f32 0.0, %v211
  %v213 = vpop.f32.mrb[0].mxu0
  %214 = vmatprep.mubr.f32.mxu0 0.0
  %215 = vmatmul.mubr.f32.gmra.mrb[0].mxu0 %v85
  %v216 = vpop.f32.mrb[0].mxu0
  %v217 = vadd.f32 0.0, %v216
  %v218 = vpop.f32.mrb[0].mxu0
  %219 = vmatprep.mubr.f32.mxu0 0.0
  %220 = vmatmul.mubr.f32.gmra.mrb[0].mxu0 %v88
  %v221 = vpop.f32.mrb[0].mxu0
  %v222 = vadd.f32 0.0, %v221
  %v223 = vpop.f32.mrb[0].mxu0
  %224 = vmatprep.mubr.f32.mxu0 0.0
  %225 = vmatmul.mubr.f32.gmra.mrb[0].mxu0 %v91
  %v226 = vpop.f32.mrb[0].mxu0
  %v227 = vadd.f32 0.0, %v226
  %v228 = vpop.f32.mrb[0].mxu0
  %229 = vmatprep.mubr.f32.mxu0 0.0
  %230 = vmatmul.mubr.f32.gmra.mrb[0].mxu0 %v94
  %v231 = vpop.f32.mrb[0].mxu0
  %v232 = vadd.f32 0.0, %v231
  %v233 = vpop.f32.mrb[0].mxu0
  %234 = vmatprep.mubr.f32.mxu0 0.0
  %235 = vmatmul.mubr.f32.gmra.mrb[0].mxu0 %v97
  %v236 = vpop.f32.mrb[0].mxu0
  %v237 = vadd.f32 0.0, %v236
  %v238 = vpop.f32.mrb[0].mxu0
  %239 = vmatprep.mubr.f32.mxu0 0.0
  %240 = vmatmul.mubr.f32.gmra.mrb[0].mxu0 %v100
  %v241 = vpop.f32.mrb[0].mxu0
  %v242 = vadd.f32 0.0, %v241
  %v243 = vpop.f32.mrb[0].mxu0
  %244 = vmatprep.mubr.f32.mxu0 0.0
  %245 = vmatmul.mubr.f32.gmra.mrb[0].mxu0 %v103
  %v246 = vpop.f32.mrb[0].mxu0
  %v247 = vadd.f32 0.0, %v246
  %v248 = vpop.f32.mrb[0].mxu0
  %249 = vdwg.mxu0
  %v250 = vld [vmem:[%s3] sm:$0xff]
  %251 = vmatprep.subr.mxu0 0.0
  %252 = vmatpush1.msra.mxu0 %v250
  %253 = vmatprep.subr.mxu0 0.0
  %254 = vmatpush1.msra.mxu0 0.0
  %255 = vmatprep.subr.mxu0 0.0
  %256 = vmatpush1.msra.mxu0 0.0
  %257 = vmatprep.subr.mxu0 0.0
  %258 = vmatpush1.msra.mxu0 0.0
  %259 = vmatprep.subr.mxu0 0.0
  %260 = vmatpush1.msra.mxu0 0.0
  %261 = vmatprep.subr.mxu0 0.0
  %262 = vmatpush1.msra.mxu0 0.0
  %263 = vmatprep.subr.mxu0 0.0
  %264 = vmatpush1.msra.mxu0 0.0
  %265 = vmatprep.subr.mxu0 0.0
  %266 = vmatpush1.msra.mxu0 0.0
  %267 = vmatprep.subr.mxu0 0.0
  %268 = vmatpush1.msra.mxu0 0.0
  %269 = vmatprep.subr.mxu0 0.0
  %270 = vmatpush1.msra.mxu0 0.0
  %271 = vmatprep.subr.mxu0 0.0
  %272 = vmatpush1.msra.mxu0 0.0
  %273 = vmatprep.subr.mxu0 0.0
  %274 = vmatpush1.msra.mxu0 0.0
  %275 = vmatprep.subr.mxu0 0.0
  %276 = vmatpush1.msra.mxu0 0.0
  %277 = vmatprep.subr.mxu0 0.0
  %278 = vmatpush1.msra.mxu0 0.0
  %279 = vmatprep.subr.mxu0 0.0
  %280 = vmatpush1.msra.mxu0 0.0
  %281 = vmatprep.subr.mxu0 0.0
  %282 = vmatpush1.msra.mxu0 0.0
  %283 = vmatprep.subr.mxu0 0.0
  %284 = vmatpush1.msra.mxu0 0.0
  %285 = vmatprep.subr.mxu0 0.0
  %286 = vmatpush1.msra.mxu0 0.0
  %287 = vmatprep.subr.mxu0 0.0
  %288 = vmatpush1.msra.mxu0 0.0
  %289 = vmatprep.subr.mxu0 0.0
  %290 = vmatpush1.msra.mxu0 0.0
  %291 = vmatprep.subr.mxu0 0.0
  %292 = vmatpush1.msra.mxu0 0.0
  %293 = vmatprep.subr.mxu0 0.0
  %294 = vmatpush1.msra.mxu0 0.0
  %295 = vmatprep.subr.mxu0 0.0
  %296 = vmatpush1.msra.mxu0 0.0
  %297 = vmatprep.subr.mxu0 0.0
  %298 = vmatpush1.msra.mxu0 0.0
  %299 = vmatprep.subr.mxu0 0.0
  %300 = vmatpush1.msra.mxu0 0.0
  %301 = vmatprep.subr.mxu0 0.0
  %302 = vmatpush1.msra.mxu0 0.0
  %303 = vmatprep.subr.mxu0 0.0
  %304 = vmatpush1.msra.mxu0 0.0
  %305 = vmatprep.subr.mxu0 0.0
  %306 = vmatpush1.msra.mxu0 0.0
  %307 = vmatprep.subr.mxu0 0.0
  %308 = vmatpush1.msra.mxu0 0.0
  %309 = vmatprep.subr.mxu0 0.0
  %310 = vmatpush1.msra.mxu0 0.0
  %311 = vmatprep.subr.mxu0 0.0
  %312 = vmatpush1.msra.mxu0 0.0
  %313 = vmatprep.subr.mxu0 0.0
  %314 = vmatpush1.msra.mxu0 0.0
  %315 = vmatprep.mubr.f32.mxu0 0.0
  %316 = vmatmul.mubr.f32.gmra.mrb[0].mxu0 %v58
  %v317 = vpop.f32.mrb[0].mxu0
  %v318 = vadd.f32 0.0, %v317
  %v319 = vpop.f32.mrb[0].mxu0
  %320 = vmatprep.mubr.f32.mxu0 0.0
  %321 = vmatmul.mubr.f32.gmra.mrb[0].mxu0 %v61
  %v322 = vpop.f32.mrb[0].mxu0
  %v323 = vadd.f32 0.0, %v322
  %v324 = vpop.f32.mrb[0].mxu0
  %325 = vmatprep.mubr.f32.mxu0 0.0
  %326 = vmatmul.mubr.f32.gmra.mrb[0].mxu0 %v64
  %v327 = vpop.f32.mrb[0].mxu0
  %v328 = vadd.f32 0.0, %v327
  %v329 = vpop.f32.mrb[0].mxu0
  %330 = vmatprep.mubr.f32.mxu0 0.0
  %331 = vmatmul.mubr.f32.gmra.mrb[0].mxu0 %v67
  %v332 = vpop.f32.mrb[0].mxu0
  %v333 = vadd.f32 0.0, %v332
  %v334 = vpop.f32.mrb[0].mxu0
  %335 = vmatprep.mubr.f32.mxu0 0.0
  %336 = vmatmul.mubr.f32.gmra.mrb[0].mxu0 %v70
  %v337 = vpop.f32.mrb[0].mxu0
  %v338 = vadd.f32 0.0, %v337
  %v339 = vpop.f32.mrb[0].mxu0
  %340 = vmatprep.mubr.f32.mxu0 0.0
  %341 = vmatmul.mubr.f32.gmra.mrb[0].mxu0 %v73
  %v342 = vpop.f32.mrb[0].mxu0
  %v343 = vadd.f32 0.0, %v342
  %v344 = vpop.f32.mrb[0].mxu0
  %345 = vmatprep.mubr.f32.mxu0 0.0
  %346 = vmatmul.mubr.f32.gmra.mrb[0].mxu0 %v76
  %v347 = vpop.f32.mrb[0].mxu0
  %v348 = vadd.f32 0.0, %v347
  %v349 = vpop.f32.mrb[0].mxu0
  %350 = vmatprep.mubr.f32.mxu0 0.0
  %351 = vmatmul.mubr.f32.gmra.mrb[0].mxu0 %v79
  %v352 = vpop.f32.mrb[0].mxu0
  %v353 = vadd.f32 0.0, %v352
  %v354 = vpop.f32.mrb[0].mxu0
  %355 = vmatprep.mubr.f32.mxu0 0.0
  %356 = vmatmul.mubr.f32.gmra.mrb[0].mxu0 %v82
  %v357 = vpop.f32.mrb[0].mxu0
  %v358 = vadd.f32 0.0, %v357
  %v359 = vpop.f32.mrb[0].mxu0
  %360 = vmatprep.mubr.f32.mxu0 0.0
  %361 = vmatmul.mubr.f32.gmra.mrb[0].mxu0 %v85
  %v362 = vpop.f32.mrb[0].mxu0
  %v363 = vadd.f32 0.0, %v362
  %v364 = vpop.f32.mrb[0].mxu0
  %365 = vmatprep.mubr.f32.mxu0 0.0
  %366 = vmatmul.mubr.f32.gmra.mrb[0].mxu0 %v88
  %v367 = vpop.f32.mrb[0].mxu0
  %v368 = vadd.f32 0.0, %v367
  %v369 = vpop.f32.mrb[0].mxu0
  %370 = vmatprep.mubr.f32.mxu0 0.0
  %371 = vmatmul.mubr.f32.gmra.mrb[0].mxu0 %v91
  %v372 = vpop.f32.mrb[0].mxu0
  %v373 = vadd.f32 0.0, %v372
  %v374 = vpop.f32.mrb[0].mxu0
  %375 = vmatprep.mubr.f32.mxu0 0.0
  %376 = vmatmul.mubr.f32.gmra.mrb[0].mxu0 %v94
  %v377 = vpop.f32.mrb[0].mxu0
  %v378 = vadd.f32 0.0, %v377
  %v379 = vpop.f32.mrb[0].mxu0
  %380 = vmatprep.mubr.f32.mxu0 0.0
  %381 = vmatmul.mubr.f32.gmra.mrb[0].mxu0 %v97
  %v382 = vpop.f32.mrb[0].mxu0
  %v383 = vadd.f32 0.0, %v382
  %v384 = vpop.f32.mrb[0].mxu0
  %385 = vmatprep.mubr.f32.mxu0 0.0
  %386 = vmatmul.mubr.f32.gmra.mrb[0].mxu0 %v100
  %v387 = vpop.f32.mrb[0].mxu0
  %v388 = vadd.f32 0.0, %v387
  %v389 = vpop.f32.mrb[0].mxu0
  %390 = vmatprep.mubr.f32.mxu0 0.0
  %391 = vmatmul.mubr.f32.gmra.mrb[0].mxu0 %v103
  %v392 = vpop.f32.mrb[0].mxu0
  %v393 = vadd.f32 0.0, %v392
  %v394 = vpop.f32.mrb[0].mxu0
  %395 = vdwg.mxu0
  %vm396 = vcmask 7168
  %v397 = vsel %vm396, %v318, 1.0
  %v398 = vsel %vm396, %v323, 1.0
  %v399 = vsel %vm396, %v328, 1.0
  %v400 = vsel %vm396, %v333, 1.0
  %v401 = vsel %vm396, %v338, 1.0
  %v402 = vsel %vm396, %v343, 1.0
  %v403 = vsel %vm396, %v348, 1.0
  %v404 = vsel %vm396, %v353, 1.0
  %v405 = vsel %vm396, %v358, 1.0
  %v406 = vsel %vm396, %v363, 1.0
  %v407 = vsel %vm396, %v368, 1.0
  %v408 = vsel %vm396, %v373, 1.0
  %v409 = vsel %vm396, %v378, 1.0
  %v410 = vsel %vm396, %v383, 1.0
  %v411 = vsel %vm396, %v388, 1.0
  %v412 = vsel %vm396, %v393, 1.0
  %v413 = vsel %vm396, 1.0, %v318
  %v414 = vsel %vm396, 1.0, %v323
  %v415 = vsel %vm396, 1.0, %v328
  %v416 = vsel %vm396, 1.0, %v333
  %v417 = vsel %vm396, 1.0, %v338
  %v418 = vsel %vm396, 1.0, %v343
  %v419 = vsel %vm396, 1.0, %v348
  %v420 = vsel %vm396, 1.0, %v353
  %v421 = vsel %vm396, 1.0, %v358
  %v422 = vsel %vm396, 1.0, %v363
  %v423 = vsel %vm396, 1.0, %v368
  %v424 = vsel %vm396, 1.0, %v373
  %v425 = vsel %vm396, 1.0, %v378
  %v426 = vsel %vm396, 1.0, %v383
  %v427 = vsel %vm396, 1.0, %v388
  %v428 = vsel %vm396, 1.0, %v393
  %vm429 = vcmask 15360
  %v431 = vsel %vm429, %v397, 0
  %v434 = vsel %vm429, %v398, 0
  %v437 = vsel %vm429, %v399, 0
  %v440 = vsel %vm429, %v400, 0
  %v443 = vsel %vm429, %v401, 0
  %v446 = vsel %vm429, %v402, 0
  %v449 = vsel %vm429, %v403, 0
  %v452 = vsel %vm429, %v404, 0
  %v455 = vsel %vm429, %v405, 0
  %v458 = vsel %vm429, %v406, 0
  %v461 = vsel %vm429, %v407, 0
  %v464 = vsel %vm429, %v408, 0
  %v467 = vsel %vm429, %v409, 0
  %v470 = vsel %vm429, %v410, 0
  %v473 = vsel %vm429, %v411, 0
  %v476 = vsel %vm429, %v412, 0
  %v479 = vsel %vm429, %v413, 0
  %v482 = vsel %vm429, %v414, 0
  %v485 = vsel %vm429, %v415, 0
  %v488 = vsel %vm429, %v416, 0
  %v491 = vsel %vm429, %v417, 0
  %v494 = vsel %vm429, %v418, 0
  %v497 = vsel %vm429, %v419, 0
  %v500 = vsel %vm429, %v420, 0
  %v503 = vsel %vm429, %v421, 0
  %v506 = vsel %vm429, %v422, 0
  %v509 = vsel %vm429, %v423, 0
  %v512 = vsel %vm429, %v424, 0
  %v515 = vsel %vm429, %v425, 0
  %v518 = vsel %vm429, %v426, 0
  %v521 = vsel %vm429, %v427, 0
  %v524 = vsel %vm429, %v428, 0
  %526 = vmatprep.subr.mxu0 0.0
  %527 = vmatpush1.xpose.msra.mxu0 %v479
  %528 = vmatprep.subr.mxu0 0.0
  %529 = vmatpush1.xpose.msra.mxu0 %v482
  %530 = vmatprep.subr.mxu0 0.0
  %531 = vmatpush1.xpose.msra.mxu0 %v485
  %532 = vmatprep.subr.mxu0 0.0
  %533 = vmatpush1.xpose.msra.mxu0 %v488
  %534 = vmatprep.subr.mxu0 0.0
  %535 = vmatpush1.xpose.msra.mxu0 %v491
  %536 = vmatprep.subr.mxu0 0.0
  %537 = vmatpush1.xpose.msra.mxu0 %v494
  %538 = vmatprep.subr.mxu0 0.0
  %539 = vmatpush1.xpose.msra.mxu0 %v497
  %540 = vmatprep.subr.mxu0 0.0
  %541 = vmatpush1.xpose.msra.mxu0 %v500
  %542 = vmatprep.subr.mxu0 0.0
  %543 = vmatpush1.xpose.msra.mxu0 %v503
  %544 = vmatprep.subr.mxu0 0.0
  %545 = vmatpush1.xpose.msra.mxu0 %v506
  %546 = vmatprep.subr.mxu0 0.0
  %547 = vmatpush1.xpose.msra.mxu0 %v509
  %548 = vmatprep.subr.mxu0 0.0
  %549 = vmatpush1.xpose.msra.mxu0 %v512
  %550 = vmatprep.subr.mxu0 0.0
  %551 = vmatpush1.xpose.msra.mxu0 %v515
  %552 = vmatprep.subr.mxu0 0.0
  %553 = vmatpush1.xpose.msra.mxu0 %v518
  %554 = vmatprep.subr.mxu0 0.0
  %555 = vmatpush1.xpose.msra.mxu0 %v521
  %556 = vmatprep.subr.mxu0 0.0
  %557 = vmatpush1.xpose.msra.mxu0 %v524
  %558 = vmatprep.subr.mxu0 0.0
  %559 = vmatpush1.xpose.msra.mxu0 0.0
  %560 = vmatprep.subr.mxu0 0.0
  %561 = vmatpush1.xpose.msra.mxu0 0.0
  %562 = vmatprep.subr.mxu0 0.0
  %563 = vmatpush1.xpose.msra.mxu0 0.0
  %564 = vmatprep.subr.mxu0 0.0
  %565 = vmatpush1.xpose.msra.mxu0 0.0
  %566 = vmatprep.subr.mxu0 0.0
  %567 = vmatpush1.xpose.msra.mxu0 0.0
  %568 = vmatprep.subr.mxu0 0.0
  %569 = vmatpush1.xpose.msra.mxu0 0.0
  %570 = vmatprep.subr.mxu0 0.0
  %571 = vmatpush1.xpose.msra.mxu0 0.0
  %572 = vmatprep.subr.mxu0 0.0
  %573 = vmatpush1.xpose.msra.mxu0 0.0
  %574 = vmatprep.subr.mxu0 0.0
  %575 = vmatpush1.xpose.msra.mxu0 0.0
  %576 = vmatprep.subr.mxu0 0.0
  %577 = vmatpush1.xpose.msra.mxu0 0.0
  %578 = vmatprep.subr.mxu0 0.0
  %579 = vmatpush1.xpose.msra.mxu0 0.0
  %580 = vmatprep.subr.mxu0 0.0
  %581 = vmatpush1.xpose.msra.mxu0 0.0
  %582 = vmatprep.subr.mxu0 0.0
  %583 = vmatpush1.xpose.msra.mxu0 0.0
  %584 = vmatprep.subr.mxu0 0.0
  %585 = vmatpush1.xpose.msra.mxu0 0.0
  %586 = vmatprep.subr.mxu0 0.0
  %587 = vmatpush1.xpose.msra.mxu0 0.0
  %588 = vmatprep.subr.mxu0 0.0
  %589 = vmatpush1.xpose.msra.mxu0 0.0
  %590 = vmatprep.mubr.f32.mxu0 0.0
  %591 = vmatmul.mubr.f32.gmra.mrb[0].mxu0 %v431
  %v592 = vpop.f32.mrb[0].mxu0
  %v593 = vadd.f32 0.0, %v592
  %v594 = vpop.f32.mrb[0].mxu0
  %595 = vmatprep.mubr.f32.mxu0 0.0
  %596 = vmatmul.mubr.f32.gmra.mrb[0].mxu0 %v434
  %v597 = vpop.f32.mrb[0].mxu0
  %v598 = vadd.f32 0.0, %v597
  %v599 = vpop.f32.mrb[0].mxu0
  %600 = vmatprep.mubr.f32.mxu0 0.0
  %601 = vmatmul.mubr.f32.gmra.mrb[0].mxu0 %v437
  %v602 = vpop.f32.mrb[0].mxu0
  %v603 = vadd.f32 0.0, %v602
  %v604 = vpop.f32.mrb[0].mxu0
  %605 = vmatprep.mubr.f32.mxu0 0.0
  %606 = vmatmul.mubr.f32.gmra.mrb[0].mxu0 %v440
  %v607 = vpop.f32.mrb[0].mxu0
  %v608 = vadd.f32 0.0, %v607
  %v609 = vpop.f32.mrb[0].mxu0
  %610 = vmatprep.mubr.f32.mxu0 0.0
  %611 = vmatmul.mubr.f32.gmra.mrb[0].mxu0 %v443
  %v612 = vpop.f32.mrb[0].mxu0
  %v613 = vadd.f32 0.0, %v612
  %v614 = vpop.f32.mrb[0].mxu0
  %615 = vmatprep.mubr.f32.mxu0 0.0
  %616 = vmatmul.mubr.f32.gmra.mrb[0].mxu0 %v446
  %v617 = vpop.f32.mrb[0].mxu0
  %v618 = vadd.f32 0.0, %v617
  %v619 = vpop.f32.mrb[0].mxu0
  %620 = vmatprep.mubr.f32.mxu0 0.0
  %621 = vmatmul.mubr.f32.gmra.mrb[0].mxu0 %v449
  %v622 = vpop.f32.mrb[0].mxu0
  %v623 = vadd.f32 0.0, %v622
  %v624 = vpop.f32.mrb[0].mxu0
  %625 = vmatprep.mubr.f32.mxu0 0.0
  %626 = vmatmul.mubr.f32.gmra.mrb[0].mxu0 %v452
  %v627 = vpop.f32.mrb[0].mxu0
  %v628 = vadd.f32 0.0, %v627
  %v629 = vpop.f32.mrb[0].mxu0
  %630 = vmatprep.mubr.f32.mxu0 0.0
  %631 = vmatmul.mubr.f32.gmra.mrb[0].mxu0 %v455
  %v632 = vpop.f32.mrb[0].mxu0
  %v633 = vadd.f32 0.0, %v632
  %v634 = vpop.f32.mrb[0].mxu0
  %635 = vmatprep.mubr.f32.mxu0 0.0
  %636 = vmatmul.mubr.f32.gmra.mrb[0].mxu0 %v458
  %v637 = vpop.f32.mrb[0].mxu0
  %v638 = vadd.f32 0.0, %v637
  %v639 = vpop.f32.mrb[0].mxu0
  %640 = vmatprep.mubr.f32.mxu0 0.0
  %641 = vmatmul.mubr.f32.gmra.mrb[0].mxu0 %v461
  %v642 = vpop.f32.mrb[0].mxu0
  %v643 = vadd.f32 0.0, %v642
  %v644 = vpop.f32.mrb[0].mxu0
  %645 = vmatprep.mubr.f32.mxu0 0.0
  %646 = vmatmul.mubr.f32.gmra.mrb[0].mxu0 %v464
  %v647 = vpop.f32.mrb[0].mxu0
  %v648 = vadd.f32 0.0, %v647
  %v649 = vpop.f32.mrb[0].mxu0
  %650 = vmatprep.mubr.f32.mxu0 0.0
  %651 = vmatmul.mubr.f32.gmra.mrb[0].mxu0 %v467
  %v652 = vpop.f32.mrb[0].mxu0
  %v653 = vadd.f32 0.0, %v652
  %v654 = vpop.f32.mrb[0].mxu0
  %655 = vmatprep.mubr.f32.mxu0 0.0
  %656 = vmatmul.mubr.f32.gmra.mrb[0].mxu0 %v470
  %v657 = vpop.f32.mrb[0].mxu0
  %v658 = vadd.f32 0.0, %v657
  %v659 = vpop.f32.mrb[0].mxu0
  %660 = vmatprep.mubr.f32.mxu0 0.0
  %661 = vmatmul.mubr.f32.gmra.mrb[0].mxu0 %v473
  %v662 = vpop.f32.mrb[0].mxu0
  %v663 = vadd.f32 0.0, %v662
  %v664 = vpop.f32.mrb[0].mxu0
  %665 = vmatprep.mubr.f32.mxu0 0.0
  %666 = vmatmul.mubr.f32.gmra.mrb[0].mxu0 %v476
  %v667 = vpop.f32.mrb[0].mxu0
  %v668 = vadd.f32 0.0, %v667
  %v669 = vpop.f32.mrb[0].mxu0
  %670 = vdwg.mxu0
  %vm671 = vcmp.gt.f32.partialorder %v593, 0.0
  %vm672 = vcmp.gt.f32.partialorder %v598, 0.0
  %vm673 = vcmp.gt.f32.partialorder %v603, 0.0
  %vm674 = vcmp.gt.f32.partialorder %v608, 0.0
  %vm675 = vcmp.gt.f32.partialorder %v613, 0.0
  %vm676 = vcmp.gt.f32.partialorder %v618, 0.0
  %vm677 = vcmp.gt.f32.partialorder %v623, 0.0
  %vm678 = vcmp.gt.f32.partialorder %v628, 0.0
  %vm679 = vcmp.gt.f32.partialorder %v633, 0.0
  %vm680 = vcmp.gt.f32.partialorder %v638, 0.0
  %vm681 = vcmp.gt.f32.partialorder %v643, 0.0
  %vm682 = vcmp.gt.f32.partialorder %v648, 0.0
  %vm683 = vcmp.gt.f32.partialorder %v653, 0.0
  %vm684 = vcmp.gt.f32.partialorder %v658, 0.0
  %vm685 = vcmp.gt.f32.partialorder %v663, 0.0
  %vm686 = vcmp.gt.f32.partialorder %v668, 0.0
  %v687 = vmul.f32 %v593, 0.2
  %v688 = vmul.f32 %v598, 0.2
  %v689 = vmul.f32 %v603, 0.2
  %v690 = vmul.f32 %v608, 0.2
  %v691 = vmul.f32 %v613, 0.2
  %v692 = vmul.f32 %v618, 0.2
  %v693 = vmul.f32 %v623, 0.2
  %v694 = vmul.f32 %v628, 0.2
  %v695 = vmul.f32 %v633, 0.2
  %v696 = vmul.f32 %v638, 0.2
  %v697 = vmul.f32 %v643, 0.2
  %v698 = vmul.f32 %v648, 0.2
  %v699 = vmul.f32 %v653, 0.2
  %v700 = vmul.f32 %v658, 0.2
  %v701 = vmul.f32 %v663, 0.2
  %v702 = vmul.f32 %v668, 0.2
  %v703 = vsel %vm671, %v593, %v687
  %v704 = vsel %vm672, %v598, %v688
  %v705 = vsel %vm673, %v603, %v689
  %v706 = vsel %vm674, %v608, %v690
  %v707 = vsel %vm675, %v613, %v691
  %v708 = vsel %vm676, %v618, %v692
  %v709 = vsel %vm677, %v623, %v693
  %v710 = vsel %vm678, %v628, %v694
  %v711 = vsel %vm679, %v633, %v695
  %v712 = vsel %vm680, %v638, %v696
  %v713 = vsel %vm681, %v643, %v697
  %v714 = vsel %vm682, %v648, %v698
  %v715 = vsel %vm683, %v653, %v699
  %v716 = vsel %vm684, %v658, %v700
  %v717 = vsel %vm685, %v663, %v701
  %v718 = vsel %vm686, %v668, %v702
  %v719 = vadd.f32 %v703, %v39
  %v720 = vadd.f32 %v704, %v40
  %v721 = vadd.f32 %v705, %v41
  %v722 = vadd.f32 %v706, %v42
  %v723 = vadd.f32 %v707, %v43
  %v724 = vadd.f32 %v708, %v44
  %v725 = vadd.f32 %v709, %v45
  %v726 = vadd.f32 %v710, %v46
  %v727 = vadd.f32 %v711, %v47
  %v728 = vadd.f32 %v712, %v48
  %v729 = vadd.f32 %v713, %v49
  %v730 = vadd.f32 %v714, %v50
  %v731 = vadd.f32 %v715, %v51
  %v732 = vadd.f32 %v716, %v52
  %v733 = vadd.f32 %v717, %v53
  %v734 = vadd.f32 %v718, %v54
  %735 = vmax.xlane.f32.xlu0 %v719
  %v736 = vpop.xlane.xlu0 %735
  %737 = vmax.xlane.f32.xlu0 %v720
  %v738 = vpop.xlane.xlu0 %737
  %739 = vmax.xlane.f32.xlu0 %v721
  %v740 = vpop.xlane.xlu0 %739
  %741 = vmax.xlane.f32.xlu0 %v722
  %v742 = vpop.xlane.xlu0 %741
  %743 = vmax.xlane.f32.xlu0 %v723
  %v744 = vpop.xlane.xlu0 %743
  %745 = vmax.xlane.f32.xlu0 %v724
  %v746 = vpop.xlane.xlu0 %745
  %747 = vmax.xlane.f32.xlu0 %v725
  %v748 = vpop.xlane.xlu0 %747
  %749 = vmax.xlane.f32.xlu0 %v726
  %v750 = vpop.xlane.xlu0 %749
  %751 = vmax.xlane.f32.xlu0 %v727
  %v752 = vpop.xlane.xlu0 %751
  %753 = vmax.xlane.f32.xlu0 %v728
  %v754 = vpop.xlane.xlu0 %753
  %755 = vmax.xlane.f32.xlu0 %v729
  %v756 = vpop.xlane.xlu0 %755
  %757 = vmax.xlane.f32.xlu0 %v730
  %v758 = vpop.xlane.xlu0 %757
  %759 = vmax.xlane.f32.xlu0 %v731
  %v760 = vpop.xlane.xlu0 %759
  %761 = vmax.xlane.f32.xlu0 %v732
  %v762 = vpop.xlane.xlu0 %761
  %763 = vmax.xlane.f32.xlu0 %v733
  %v764 = vpop.xlane.xlu0 %763
  %765 = vmax.xlane.f32.xlu0 %v734
  %v766 = vpop.xlane.xlu0 %765
  %v767 = vsub.f32 %v719, %v736
  %v768 = vsub.f32 %v720, %v738
  %v769 = vsub.f32 %v721, %v740
  %v770 = vsub.f32 %v722, %v742
  %v771 = vsub.f32 %v723, %v744
  %v772 = vsub.f32 %v724, %v746
  %v773 = vsub.f32 %v725, %v748
  %v774 = vsub.f32 %v726, %v750
  %v775 = vsub.f32 %v727, %v752
  %v776 = vsub.f32 %v728, %v754
  %v777 = vsub.f32 %v729, %v756
  %v778 = vsub.f32 %v730, %v758
  %v779 = vsub.f32 %v731, %v760
  %v780 = vsub.f32 %v732, %v762
  %v781 = vsub.f32 %v733, %v764
  %v782 = vsub.f32 %v734, %v766
  %v783 = vmul.f32 %v767, 1.442695
  %v784 = vpow.pop %v783
  %v785 = vmul.f32 %v768, 1.442695
  %v786 = vpow.pop %v785
  %v787 = vmul.f32 %v769, 1.442695
  %v788 = vpow.pop %v787
  %v789 = vmul.f32 %v770, 1.442695
  %v790 = vpow.pop %v789
  %v791 = vmul.f32 %v771, 1.442695
  %v792 = vpow.pop %v791
  %v793 = vmul.f32 %v772, 1.442695
  %v794 = vpow.pop %v793
  %v795 = vmul.f32 %v773, 1.442695
  %v796 = vpow.pop %v795
  %v797 = vmul.f32 %v774, 1.442695
  %v798 = vpow.pop %v797
  %v799 = vmul.f32 %v775, 1.442695
  %v800 = vpow.pop %v799
  %v801 = vmul.f32 %v776, 1.442695
  %v802 = vpow.pop %v801
  %v803 = vmul.f32 %v777, 1.442695
  %v804 = vpow.pop %v803
  %v805 = vmul.f32 %v778, 1.442695
  %v806 = vpow.pop %v805
  %v807 = vmul.f32 %v779, 1.442695
  %v808 = vpow.pop %v807
  %v809 = vmul.f32 %v780, 1.442695
  %v810 = vpow.pop %v809
  %v811 = vmul.f32 %v781, 1.442695
  %v812 = vpow.pop %v811
  %v813 = vmul.f32 %v782, 1.442695
  %v814 = vpow.pop %v813
  %815 = vadd.xlane.f32.xlu0 %v784
  %v816 = vpop.xlane.xlu0 %815
  %817 = vadd.xlane.f32.xlu0 %v786
  %v818 = vpop.xlane.xlu0 %817
  %819 = vadd.xlane.f32.xlu0 %v788
  %v820 = vpop.xlane.xlu0 %819
  %821 = vadd.xlane.f32.xlu0 %v790
  %v822 = vpop.xlane.xlu0 %821
  %823 = vadd.xlane.f32.xlu0 %v792
  %v824 = vpop.xlane.xlu0 %823
  %825 = vadd.xlane.f32.xlu0 %v794
  %v826 = vpop.xlane.xlu0 %825
  %827 = vadd.xlane.f32.xlu0 %v796
  %v828 = vpop.xlane.xlu0 %827
  %829 = vadd.xlane.f32.xlu0 %v798
  %v830 = vpop.xlane.xlu0 %829
  %831 = vadd.xlane.f32.xlu0 %v800
  %v832 = vpop.xlane.xlu0 %831
  %833 = vadd.xlane.f32.xlu0 %v802
  %v834 = vpop.xlane.xlu0 %833
  %835 = vadd.xlane.f32.xlu0 %v804
  %v836 = vpop.xlane.xlu0 %835
  %837 = vadd.xlane.f32.xlu0 %v806
  %v838 = vpop.xlane.xlu0 %837
  %839 = vadd.xlane.f32.xlu0 %v808
  %v840 = vpop.xlane.xlu0 %839
  %841 = vadd.xlane.f32.xlu0 %v810
  %v842 = vpop.xlane.xlu0 %841
  %843 = vadd.xlane.f32.xlu0 %v812
  %v844 = vpop.xlane.xlu0 %843
  %845 = vadd.xlane.f32.xlu0 %v814
  %v846 = vpop.xlane.xlu0 %845
  %v847 = vrcp.pop %v816
  %v848 = vmul.f32 %v784, %v847
  %v849 = vrcp.pop %v818
  %v850 = vmul.f32 %v786, %v849
  %v851 = vrcp.pop %v820
  %v852 = vmul.f32 %v788, %v851
  %v853 = vrcp.pop %v822
  %v854 = vmul.f32 %v790, %v853
  %v855 = vrcp.pop %v824
  %v856 = vmul.f32 %v792, %v855
  %v857 = vrcp.pop %v826
  %v858 = vmul.f32 %v794, %v857
  %v859 = vrcp.pop %v828
  %v860 = vmul.f32 %v796, %v859
  %v861 = vrcp.pop %v830
  %v862 = vmul.f32 %v798, %v861
  %v863 = vrcp.pop %v832
  %v864 = vmul.f32 %v800, %v863
  %v865 = vrcp.pop %v834
  %v866 = vmul.f32 %v802, %v865
  %v867 = vrcp.pop %v836
  %v868 = vmul.f32 %v804, %v867
  %v869 = vrcp.pop %v838
  %v870 = vmul.f32 %v806, %v869
  %v871 = vrcp.pop %v840
  %v872 = vmul.f32 %v808, %v871
  %v873 = vrcp.pop %v842
  %v874 = vmul.f32 %v810, %v873
  %v875 = vrcp.pop %v844
  %v876 = vmul.f32 %v812, %v875
  %v877 = vrcp.pop %v846
  %v878 = vmul.f32 %v814, %v877
  %879 = vmatprep.subr.mxu0 0.0
  %880 = vmatpush1.msra.mxu0 %v172
  %881 = vmatprep.subr.mxu0 0.0
  %882 = vmatpush1.msra.mxu0 %v177
  %883 = vmatprep.subr.mxu0 0.0
  %884 = vmatpush1.msra.mxu0 %v182
  %885 = vmatprep.subr.mxu0 0.0
  %886 = vmatpush1.msra.mxu0 %v187
  %887 = vmatprep.subr.mxu0 0.0
  %888 = vmatpush1.msra.mxu0 %v192
  %889 = vmatprep.subr.mxu0 0.0
  %890 = vmatpush1.msra.mxu0 %v197
  %891 = vmatprep.subr.mxu0 0.0
  %892 = vmatpush1.msra.mxu0 %v202
  %893 = vmatprep.subr.mxu0 0.0
  %894 = vmatpush1.msra.mxu0 %v207
  %895 = vmatprep.subr.mxu0 0.0
  %896 = vmatpush1.msra.mxu0 %v212
  %897 = vmatprep.subr.mxu0 0.0
  %898 = vmatpush1.msra.mxu0 %v217
  %899 = vmatprep.subr.mxu0 0.0
  %900 = vmatpush1.msra.mxu0 %v222
  %901 = vmatprep.subr.mxu0 0.0
  %902 = vmatpush1.msra.mxu0 %v227
  %903 = vmatprep.subr.mxu0 0.0
  %904 = vmatpush1.msra.mxu0 %v232
  %905 = vmatprep.subr.mxu0 0.0
  %906 = vmatpush1.msra.mxu0 %v237
  %907 = vmatprep.subr.mxu0 0.0
  %908 = vmatpush1.msra.mxu0 %v242
  %909 = vmatprep.subr.mxu0 0.0
  %910 = vmatpush1.msra.mxu0 %v247
  %911 = vmatprep.subr.mxu0 0.0
  %912 = vmatpush1.msra.mxu0 0.0
  %913 = vmatprep.subr.mxu0 0.0
  %914 = vmatpush1.msra.mxu0 0.0
  %915 = vmatprep.subr.mxu0 0.0
  %916 = vmatpush1.msra.mxu0 0.0
  %917 = vmatprep.subr.mxu0 0.0
  %918 = vmatpush1.msra.mxu0 0.0
  %919 = vmatprep.subr.mxu0 0.0
  %920 = vmatpush1.msra.mxu0 0.0
  %921 = vmatprep.subr.mxu0 0.0
  %922 = vmatpush1.msra.mxu0 0.0
  %923 = vmatprep.subr.mxu0 0.0
  %924 = vmatpush1.msra.mxu0 0.0
  %925 = vmatprep.subr.mxu0 0.0
  %926 = vmatpush1.msra.mxu0 0.0
  %927 = vmatprep.subr.mxu0 0.0
  %928 = vmatpush1.msra.mxu0 0.0
  %929 = vmatprep.subr.mxu0 0.0
  %930 = vmatpush1.msra.mxu0 0.0
  %931 = vmatprep.subr.mxu0 0.0
  %932 = vmatpush1.msra.mxu0 0.0
  %933 = vmatprep.subr.mxu0 0.0
  %934 = vmatpush1.msra.mxu0 0.0
  %935 = vmatprep.subr.mxu0 0.0
  %936 = vmatpush1.msra.mxu0 0.0
  %937 = vmatprep.subr.mxu0 0.0
  %938 = vmatpush1.msra.mxu0 0.0
  %939 = vmatprep.subr.mxu0 0.0
  %940 = vmatpush1.msra.mxu0 0.0
  %941 = vmatprep.subr.mxu0 0.0
  %942 = vmatpush1.msra.mxu0 0.0
  %943 = vmatprep.mubr.f32.mxu0 0.0
  %944 = vmatmul.mubr.f32.gmra.mrb[0].mxu0 %v848
  %v945 = vpop.f32.mrb[0].mxu0
  %v946 = vadd.f32 0.0, %v945
  %v947 = vpop.f32.mrb[0].mxu0
  %948 = vmatprep.mubr.f32.mxu0 0.0
  %949 = vmatmul.mubr.f32.gmra.mrb[0].mxu0 %v850
  %v950 = vpop.f32.mrb[0].mxu0
  %v951 = vadd.f32 0.0, %v950
  %v952 = vpop.f32.mrb[0].mxu0
  %953 = vmatprep.mubr.f32.mxu0 0.0
  %954 = vmatmul.mubr.f32.gmra.mrb[0].mxu0 %v852
  %v955 = vpop.f32.mrb[0].mxu0
  %v956 = vadd.f32 0.0, %v955
  %v957 = vpop.f32.mrb[0].mxu0
  %958 = vmatprep.mubr.f32.mxu0 0.0
  %959 = vmatmul.mubr.f32.gmra.mrb[0].mxu0 %v854
  %v960 = vpop.f32.mrb[0].mxu0
  %v961 = vadd.f32 0.0, %v960
  %v962 = vpop.f32.mrb[0].mxu0
  %963 = vmatprep.mubr.f32.mxu0 0.0
  %964 = vmatmul.mubr.f32.gmra.mrb[0].mxu0 %v856
  %v965 = vpop.f32.mrb[0].mxu0
  %v966 = vadd.f32 0.0, %v965
  %v967 = vpop.f32.mrb[0].mxu0
  %968 = vmatprep.mubr.f32.mxu0 0.0
  %969 = vmatmul.mubr.f32.gmra.mrb[0].mxu0 %v858
  %v970 = vpop.f32.mrb[0].mxu0
  %v971 = vadd.f32 0.0, %v970
  %v972 = vpop.f32.mrb[0].mxu0
  %973 = vmatprep.mubr.f32.mxu0 0.0
  %974 = vmatmul.mubr.f32.gmra.mrb[0].mxu0 %v860
  %v975 = vpop.f32.mrb[0].mxu0
  %v976 = vadd.f32 0.0, %v975
  %v977 = vpop.f32.mrb[0].mxu0
  %978 = vmatprep.mubr.f32.mxu0 0.0
  %979 = vmatmul.mubr.f32.gmra.mrb[0].mxu0 %v862
  %v980 = vpop.f32.mrb[0].mxu0
  %v981 = vadd.f32 0.0, %v980
  %v982 = vpop.f32.mrb[0].mxu0
  %983 = vmatprep.mubr.f32.mxu0 0.0
  %984 = vmatmul.mubr.f32.gmra.mrb[0].mxu0 %v864
  %v985 = vpop.f32.mrb[0].mxu0
  %v986 = vadd.f32 0.0, %v985
  %v987 = vpop.f32.mrb[0].mxu0
  %988 = vmatprep.mubr.f32.mxu0 0.0
  %989 = vmatmul.mubr.f32.gmra.mrb[0].mxu0 %v866
  %v990 = vpop.f32.mrb[0].mxu0
  %v991 = vadd.f32 0.0, %v990
  %v992 = vpop.f32.mrb[0].mxu0
  %993 = vmatprep.mubr.f32.mxu0 0.0
  %994 = vmatmul.mubr.f32.gmra.mrb[0].mxu0 %v868
  %v995 = vpop.f32.mrb[0].mxu0
  %v996 = vadd.f32 0.0, %v995
  %v997 = vpop.f32.mrb[0].mxu0
  %998 = vmatprep.mubr.f32.mxu0 0.0
  %999 = vmatmul.mubr.f32.gmra.mrb[0].mxu0 %v870
  %v1000 = vpop.f32.mrb[0].mxu0
  %v1001 = vadd.f32 0.0, %v1000
  %v1002 = vpop.f32.mrb[0].mxu0
  %1003 = vmatprep.mubr.f32.mxu0 0.0
  %1004 = vmatmul.mubr.f32.gmra.mrb[0].mxu0 %v872
  %v1005 = vpop.f32.mrb[0].mxu0
  %v1006 = vadd.f32 0.0, %v1005
  %v1007 = vpop.f32.mrb[0].mxu0
  %1008 = vmatprep.mubr.f32.mxu0 0.0
  %1009 = vmatmul.mubr.f32.gmra.mrb[0].mxu0 %v874
  %v1010 = vpop.f32.mrb[0].mxu0
  %v1011 = vadd.f32 0.0, %v1010
  %v1012 = vpop.f32.mrb[0].mxu0
  %1013 = vmatprep.mubr.f32.mxu0 0.0
  %1014 = vmatmul.mubr.f32.gmra.mrb[0].mxu0 %v876
  %v1015 = vpop.f32.mrb[0].mxu0
  %v1016 = vadd.f32 0.0, %v1015
  %v1017 = vpop.f32.mrb[0].mxu0
  %1018 = vmatprep.mubr.f32.mxu0 0.0
  %1019 = vmatmul.mubr.f32.gmra.mrb[0].mxu0 %v878
  %v1020 = vpop.f32.mrb[0].mxu0
  %v1021 = vadd.f32 0.0, %v1020
  %v1022 = vpop.f32.mrb[0].mxu0
  %1023 = vdwg.mxu0
  %1040 = vrot.lane.b32.xlu0 %v318, 126
  %v1041 = vpop.permute.xlu0 %1040
  %1042 = vrot.lane.b32.xlu0 %v323, 126
  %v1043 = vpop.permute.xlu0 %1042
  %1044 = vrot.lane.b32.xlu0 %v328, 126
  %v1045 = vpop.permute.xlu0 %1044
  %1046 = vrot.lane.b32.xlu0 %v333, 126
  %v1047 = vpop.permute.xlu0 %1046
  %1048 = vrot.lane.b32.xlu0 %v338, 126
  %v1049 = vpop.permute.xlu0 %1048
  %1050 = vrot.lane.b32.xlu0 %v343, 126
  %v1051 = vpop.permute.xlu0 %1050
  %1052 = vrot.lane.b32.xlu0 %v348, 126
  %v1053 = vpop.permute.xlu0 %1052
  %1054 = vrot.lane.b32.xlu0 %v353, 126
  %v1055 = vpop.permute.xlu0 %1054
  %1056 = vrot.lane.b32.xlu0 %v358, 126
  %v1057 = vpop.permute.xlu0 %1056
  %1058 = vrot.lane.b32.xlu0 %v363, 126
  %v1059 = vpop.permute.xlu0 %1058
  %1060 = vrot.lane.b32.xlu0 %v368, 126
  %v1061 = vpop.permute.xlu0 %1060
  %1062 = vrot.lane.b32.xlu0 %v373, 126
  %v1063 = vpop.permute.xlu0 %1062
  %1064 = vrot.lane.b32.xlu0 %v378, 126
  %v1065 = vpop.permute.xlu0 %1064
  %1066 = vrot.lane.b32.xlu0 %v383, 126
  %v1067 = vpop.permute.xlu0 %1066
  %1068 = vrot.lane.b32.xlu0 %v388, 126
  %v1069 = vpop.permute.xlu0 %1068
  %1070 = vrot.lane.b32.xlu0 %v393, 126
  %v1071 = vpop.permute.xlu0 %1070
  %v1088 = vsel %vm396, %v1041, 1.0
  %v1089 = vsel %vm396, %v1043, 1.0
  %v1090 = vsel %vm396, %v1045, 1.0
  %v1091 = vsel %vm396, %v1047, 1.0
  %v1092 = vsel %vm396, %v1049, 1.0
  %v1093 = vsel %vm396, %v1051, 1.0
  %v1094 = vsel %vm396, %v1053, 1.0
  %v1095 = vsel %vm396, %v1055, 1.0
  %v1096 = vsel %vm396, %v1057, 1.0
  %v1097 = vsel %vm396, %v1059, 1.0
  %v1098 = vsel %vm396, %v1061, 1.0
  %v1099 = vsel %vm396, %v1063, 1.0
  %v1100 = vsel %vm396, %v1065, 1.0
  %v1101 = vsel %vm396, %v1067, 1.0
  %v1102 = vsel %vm396, %v1069, 1.0
  %v1103 = vsel %vm396, %v1071, 1.0
  %v1104 = vsel %vm396, 1.0, %v1041
  %v1105 = vsel %vm396, 1.0, %v1043
  %v1106 = vsel %vm396, 1.0, %v1045
  %v1107 = vsel %vm396, 1.0, %v1047
  %v1108 = vsel %vm396, 1.0, %v1049
  %v1109 = vsel %vm396, 1.0, %v1051
  %v1110 = vsel %vm396, 1.0, %v1053
  %v1111 = vsel %vm396, 1.0, %v1055
  %v1112 = vsel %vm396, 1.0, %v1057
  %v1113 = vsel %vm396, 1.0, %v1059
  %v1114 = vsel %vm396, 1.0, %v1061
  %v1115 = vsel %vm396, 1.0, %v1063
  %v1116 = vsel %vm396, 1.0, %v1065
  %v1117 = vsel %vm396, 1.0, %v1067
  %v1118 = vsel %vm396, 1.0, %v1069
  %v1119 = vsel %vm396, 1.0, %v1071
  %v1121 = vsel %vm429, %v1088, 0
  %v1124 = vsel %vm429, %v1089, 0
  %v1127 = vsel %vm429, %v1090, 0
  %v1130 = vsel %vm429, %v1091, 0
  %v1133 = vsel %vm429, %v1092, 0
  %v1136 = vsel %vm429, %v1093, 0
  %v1139 = vsel %vm429, %v1094, 0
  %v1142 = vsel %vm429, %v1095, 0
  %v1145 = vsel %vm429, %v1096, 0
  %v1148 = vsel %vm429, %v1097, 0
  %v1151 = vsel %vm429, %v1098, 0
  %v1154 = vsel %vm429, %v1099, 0
  %v1157 = vsel %vm429, %v1100, 0
  %v1160 = vsel %vm429, %v1101, 0
  %v1163 = vsel %vm429, %v1102, 0
  %v1166 = vsel %vm429, %v1103, 0
  %v1169 = vsel %vm429, %v1104, 0
  %v1172 = vsel %vm429, %v1105, 0
  %v1175 = vsel %vm429, %v1106, 0
  %v1178 = vsel %vm429, %v1107, 0
  %v1181 = vsel %vm429, %v1108, 0
  %v1184 = vsel %vm429, %v1109, 0
  %v1187 = vsel %vm429, %v1110, 0
  %v1190 = vsel %vm429, %v1111, 0
  %v1193 = vsel %vm429, %v1112, 0
  %v1196 = vsel %vm429, %v1113, 0
  %v1199 = vsel %vm429, %v1114, 0
  %v1202 = vsel %vm429, %v1115, 0
  %v1205 = vsel %vm429, %v1116, 0
  %v1208 = vsel %vm429, %v1117, 0
  %v1211 = vsel %vm429, %v1118, 0
  %v1214 = vsel %vm429, %v1119, 0
  %1216 = vmatprep.subr.mxu0 0.0
  %1217 = vmatpush1.xpose.msra.mxu0 %v1169
  %1218 = vmatprep.subr.mxu0 0.0
  %1219 = vmatpush1.xpose.msra.mxu0 %v1172
  %1220 = vmatprep.subr.mxu0 0.0
  %1221 = vmatpush1.xpose.msra.mxu0 %v1175
  %1222 = vmatprep.subr.mxu0 0.0
  %1223 = vmatpush1.xpose.msra.mxu0 %v1178
  %1224 = vmatprep.subr.mxu0 0.0
  %1225 = vmatpush1.xpose.msra.mxu0 %v1181
  %1226 = vmatprep.subr.mxu0 0.0
  %1227 = vmatpush1.xpose.msra.mxu0 %v1184
  %1228 = vmatprep.subr.mxu0 0.0
  %1229 = vmatpush1.xpose.msra.mxu0 %v1187
  %1230 = vmatprep.subr.mxu0 0.0
  %1231 = vmatpush1.xpose.msra.mxu0 %v1190
  %1232 = vmatprep.subr.mxu0 0.0
  %1233 = vmatpush1.xpose.msra.mxu0 %v1193
  %1234 = vmatprep.subr.mxu0 0.0
  %1235 = vmatpush1.xpose.msra.mxu0 %v1196
  %1236 = vmatprep.subr.mxu0 0.0
  %1237 = vmatpush1.xpose.msra.mxu0 %v1199
  %1238 = vmatprep.subr.mxu0 0.0
  %1239 = vmatpush1.xpose.msra.mxu0 %v1202
  %1240 = vmatprep.subr.mxu0 0.0
  %1241 = vmatpush1.xpose.msra.mxu0 %v1205
  %1242 = vmatprep.subr.mxu0 0.0
  %1243 = vmatpush1.xpose.msra.mxu0 %v1208
  %1244 = vmatprep.subr.mxu0 0.0
  %1245 = vmatpush1.xpose.msra.mxu0 %v1211
  %1246 = vmatprep.subr.mxu0 0.0
  %1247 = vmatpush1.xpose.msra.mxu0 %v1214
  %1248 = vmatprep.subr.mxu0 0.0
  %1249 = vmatpush1.xpose.msra.mxu0 0.0
  %1250 = vmatprep.subr.mxu0 0.0
  %1251 = vmatpush1.xpose.msra.mxu0 0.0
  %1252 = vmatprep.subr.mxu0 0.0
  %1253 = vmatpush1.xpose.msra.mxu0 0.0
  %1254 = vmatprep.subr.mxu0 0.0
  %1255 = vmatpush1.xpose.msra.mxu0 0.0
  %1256 = vmatprep.subr.mxu0 0.0
  %1257 = vmatpush1.xpose.msra.mxu0 0.0
  %1258 = vmatprep.subr.mxu0 0.0
  %1259 = vmatpush1.xpose.msra.mxu0 0.0
  %1260 = vmatprep.subr.mxu0 0.0
  %1261 = vmatpush1.xpose.msra.mxu0 0.0
  %1262 = vmatprep.subr.mxu0 0.0
  %1263 = vmatpush1.xpose.msra.mxu0 0.0
  %1264 = vmatprep.subr.mxu0 0.0
  %1265 = vmatpush1.xpose.msra.mxu0 0.0
  %1266 = vmatprep.subr.mxu0 0.0
  %1267 = vmatpush1.xpose.msra.mxu0 0.0
  %1268 = vmatprep.subr.mxu0 0.0
  %1269 = vmatpush1.xpose.msra.mxu0 0.0
  %1270 = vmatprep.subr.mxu0 0.0
  %1271 = vmatpush1.xpose.msra.mxu0 0.0
  %1272 = vmatprep.subr.mxu0 0.0
  %1273 = vmatpush1.xpose.msra.mxu0 0.0
  %1274 = vmatprep.subr.mxu0 0.0
  %1275 = vmatpush1.xpose.msra.mxu0 0.0
  %1276 = vmatprep.subr.mxu0 0.0
  %1277 = vmatpush1.xpose.msra.mxu0 0.0
  %1278 = vmatprep.subr.mxu0 0.0
  %1279 = vmatpush1.xpose.msra.mxu0 0.0
  %1280 = vmatprep.mubr.f32.mxu0 0.0
  %1281 = vmatmul.mubr.f32.gmra.mrb[0].mxu0 %v1121
  %v1282 = vpop.f32.mrb[0].mxu0
  %v1283 = vadd.f32 0.0, %v1282
  %v1284 = vpop.f32.mrb[0].mxu0
  %1285 = vmatprep.mubr.f32.mxu0 0.0
  %1286 = vmatmul.mubr.f32.gmra.mrb[0].mxu0 %v1124
  %v1287 = vpop.f32.mrb[0].mxu0
  %v1288 = vadd.f32 0.0, %v1287
  %v1289 = vpop.f32.mrb[0].mxu0
  %1290 = vmatprep.mubr.f32.mxu0 0.0
  %1291 = vmatmul.mubr.f32.gmra.mrb[0].mxu0 %v1127
  %v1292 = vpop.f32.mrb[0].mxu0
  %v1293 = vadd.f32 0.0, %v1292
  %v1294 = vpop.f32.mrb[0].mxu0
  %1295 = vmatprep.mubr.f32.mxu0 0.0
  %1296 = vmatmul.mubr.f32.gmra.mrb[0].mxu0 %v1130
  %v1297 = vpop.f32.mrb[0].mxu0
  %v1298 = vadd.f32 0.0, %v1297
  %v1299 = vpop.f32.mrb[0].mxu0
  %1300 = vmatprep.mubr.f32.mxu0 0.0
  %1301 = vmatmul.mubr.f32.gmra.mrb[0].mxu0 %v1133
  %v1302 = vpop.f32.mrb[0].mxu0
  %v1303 = vadd.f32 0.0, %v1302
  %v1304 = vpop.f32.mrb[0].mxu0
  %1305 = vmatprep.mubr.f32.mxu0 0.0
  %1306 = vmatmul.mubr.f32.gmra.mrb[0].mxu0 %v1136
  %v1307 = vpop.f32.mrb[0].mxu0
  %v1308 = vadd.f32 0.0, %v1307
  %v1309 = vpop.f32.mrb[0].mxu0
  %1310 = vmatprep.mubr.f32.mxu0 0.0
  %1311 = vmatmul.mubr.f32.gmra.mrb[0].mxu0 %v1139
  %v1312 = vpop.f32.mrb[0].mxu0
  %v1313 = vadd.f32 0.0, %v1312
  %v1314 = vpop.f32.mrb[0].mxu0
  %1315 = vmatprep.mubr.f32.mxu0 0.0
  %1316 = vmatmul.mubr.f32.gmra.mrb[0].mxu0 %v1142
  %v1317 = vpop.f32.mrb[0].mxu0
  %v1318 = vadd.f32 0.0, %v1317
  %v1319 = vpop.f32.mrb[0].mxu0
  %1320 = vmatprep.mubr.f32.mxu0 0.0
  %1321 = vmatmul.mubr.f32.gmra.mrb[0].mxu0 %v1145
  %v1322 = vpop.f32.mrb[0].mxu0
  %v1323 = vadd.f32 0.0, %v1322
  %v1324 = vpop.f32.mrb[0].mxu0
  %1325 = vmatprep.mubr.f32.mxu0 0.0
  %1326 = vmatmul.mubr.f32.gmra.mrb[0].mxu0 %v1148
  %v1327 = vpop.f32.mrb[0].mxu0
  %v1328 = vadd.f32 0.0, %v1327
  %v1329 = vpop.f32.mrb[0].mxu0
  %1330 = vmatprep.mubr.f32.mxu0 0.0
  %1331 = vmatmul.mubr.f32.gmra.mrb[0].mxu0 %v1151
  %v1332 = vpop.f32.mrb[0].mxu0
  %v1333 = vadd.f32 0.0, %v1332
  %v1334 = vpop.f32.mrb[0].mxu0
  %1335 = vmatprep.mubr.f32.mxu0 0.0
  %1336 = vmatmul.mubr.f32.gmra.mrb[0].mxu0 %v1154
  %v1337 = vpop.f32.mrb[0].mxu0
  %v1338 = vadd.f32 0.0, %v1337
  %v1339 = vpop.f32.mrb[0].mxu0
  %1340 = vmatprep.mubr.f32.mxu0 0.0
  %1341 = vmatmul.mubr.f32.gmra.mrb[0].mxu0 %v1157
  %v1342 = vpop.f32.mrb[0].mxu0
  %v1343 = vadd.f32 0.0, %v1342
  %v1344 = vpop.f32.mrb[0].mxu0
  %1345 = vmatprep.mubr.f32.mxu0 0.0
  %1346 = vmatmul.mubr.f32.gmra.mrb[0].mxu0 %v1160
  %v1347 = vpop.f32.mrb[0].mxu0
  %v1348 = vadd.f32 0.0, %v1347
  %v1349 = vpop.f32.mrb[0].mxu0
  %1350 = vmatprep.mubr.f32.mxu0 0.0
  %1351 = vmatmul.mubr.f32.gmra.mrb[0].mxu0 %v1163
  %v1352 = vpop.f32.mrb[0].mxu0
  %v1353 = vadd.f32 0.0, %v1352
  %v1354 = vpop.f32.mrb[0].mxu0
  %1355 = vmatprep.mubr.f32.mxu0 0.0
  %1356 = vmatmul.mubr.f32.gmra.mrb[0].mxu0 %v1166
  %v1357 = vpop.f32.mrb[0].mxu0
  %v1358 = vadd.f32 0.0, %v1357
  %v1359 = vpop.f32.mrb[0].mxu0
  %1360 = vdwg.mxu0
  %vm1361 = vcmp.gt.f32.partialorder %v1283, 0.0
  %vm1362 = vcmp.gt.f32.partialorder %v1288, 0.0
  %vm1363 = vcmp.gt.f32.partialorder %v1293, 0.0
  %vm1364 = vcmp.gt.f32.partialorder %v1298, 0.0
  %vm1365 = vcmp.gt.f32.partialorder %v1303, 0.0
  %vm1366 = vcmp.gt.f32.partialorder %v1308, 0.0
  %vm1367 = vcmp.gt.f32.partialorder %v1313, 0.0
  %vm1368 = vcmp.gt.f32.partialorder %v1318, 0.0
  %vm1369 = vcmp.gt.f32.partialorder %v1323, 0.0
  %vm1370 = vcmp.gt.f32.partialorder %v1328, 0.0
  %vm1371 = vcmp.gt.f32.partialorder %v1333, 0.0
  %vm1372 = vcmp.gt.f32.partialorder %v1338, 0.0
  %vm1373 = vcmp.gt.f32.partialorder %v1343, 0.0
  %vm1374 = vcmp.gt.f32.partialorder %v1348, 0.0
  %vm1375 = vcmp.gt.f32.partialorder %v1353, 0.0
  %vm1376 = vcmp.gt.f32.partialorder %v1358, 0.0
  %v1377 = vmul.f32 %v1283, 0.2
  %v1378 = vmul.f32 %v1288, 0.2
  %v1379 = vmul.f32 %v1293, 0.2
  %v1380 = vmul.f32 %v1298, 0.2
  %v1381 = vmul.f32 %v1303, 0.2
  %v1382 = vmul.f32 %v1308, 0.2
  %v1383 = vmul.f32 %v1313, 0.2
  %v1384 = vmul.f32 %v1318, 0.2
  %v1385 = vmul.f32 %v1323, 0.2
  %v1386 = vmul.f32 %v1328, 0.2
  %v1387 = vmul.f32 %v1333, 0.2
  %v1388 = vmul.f32 %v1338, 0.2
  %v1389 = vmul.f32 %v1343, 0.2
  %v1390 = vmul.f32 %v1348, 0.2
  %v1391 = vmul.f32 %v1353, 0.2
  %v1392 = vmul.f32 %v1358, 0.2
  %v1393 = vsel %vm1361, %v1283, %v1377
  %v1394 = vsel %vm1362, %v1288, %v1378
  %v1395 = vsel %vm1363, %v1293, %v1379
  %v1396 = vsel %vm1364, %v1298, %v1380
  %v1397 = vsel %vm1365, %v1303, %v1381
  %v1398 = vsel %vm1366, %v1308, %v1382
  %v1399 = vsel %vm1367, %v1313, %v1383
  %v1400 = vsel %vm1368, %v1318, %v1384
  %v1401 = vsel %vm1369, %v1323, %v1385
  %v1402 = vsel %vm1370, %v1328, %v1386
  %v1403 = vsel %vm1371, %v1333, %v1387
  %v1404 = vsel %vm1372, %v1338, %v1388
  %v1405 = vsel %vm1373, %v1343, %v1389
  %v1406 = vsel %vm1374, %v1348, %v1390
  %v1407 = vsel %vm1375, %v1353, %v1391
  %v1408 = vsel %vm1376, %v1358, %v1392
  %v1409 = vadd.f32 %v1393, %v39
  %v1410 = vadd.f32 %v1394, %v40
  %v1411 = vadd.f32 %v1395, %v41
  %v1412 = vadd.f32 %v1396, %v42
  %v1413 = vadd.f32 %v1397, %v43
  %v1414 = vadd.f32 %v1398, %v44
  %v1415 = vadd.f32 %v1399, %v45
  %v1416 = vadd.f32 %v1400, %v46
  %v1417 = vadd.f32 %v1401, %v47
  %v1418 = vadd.f32 %v1402, %v48
  %v1419 = vadd.f32 %v1403, %v49
  %v1420 = vadd.f32 %v1404, %v50
  %v1421 = vadd.f32 %v1405, %v51
  %v1422 = vadd.f32 %v1406, %v52
  %v1423 = vadd.f32 %v1407, %v53
  %v1424 = vadd.f32 %v1408, %v54
  %1425 = vmax.xlane.f32.xlu0 %v1409
  %v1426 = vpop.xlane.xlu0 %1425
  %1427 = vmax.xlane.f32.xlu0 %v1410
  %v1428 = vpop.xlane.xlu0 %1427
  %1429 = vmax.xlane.f32.xlu0 %v1411
  %v1430 = vpop.xlane.xlu0 %1429
  %1431 = vmax.xlane.f32.xlu0 %v1412
  %v1432 = vpop.xlane.xlu0 %1431
  %1433 = vmax.xlane.f32.xlu0 %v1413
  %v1434 = vpop.xlane.xlu0 %1433
  %1435 = vmax.xlane.f32.xlu0 %v1414
  %v1436 = vpop.xlane.xlu0 %1435
  %1437 = vmax.xlane.f32.xlu0 %v1415
  %v1438 = vpop.xlane.xlu0 %1437
  %1439 = vmax.xlane.f32.xlu0 %v1416
  %v1440 = vpop.xlane.xlu0 %1439
  %1441 = vmax.xlane.f32.xlu0 %v1417
  %v1442 = vpop.xlane.xlu0 %1441
  %1443 = vmax.xlane.f32.xlu0 %v1418
  %v1444 = vpop.xlane.xlu0 %1443
  %1445 = vmax.xlane.f32.xlu0 %v1419
  %v1446 = vpop.xlane.xlu0 %1445
  %1447 = vmax.xlane.f32.xlu0 %v1420
  %v1448 = vpop.xlane.xlu0 %1447
  %1449 = vmax.xlane.f32.xlu0 %v1421
  %v1450 = vpop.xlane.xlu0 %1449
  %1451 = vmax.xlane.f32.xlu0 %v1422
  %v1452 = vpop.xlane.xlu0 %1451
  %1453 = vmax.xlane.f32.xlu0 %v1423
  %v1454 = vpop.xlane.xlu0 %1453
  %1455 = vmax.xlane.f32.xlu0 %v1424
  %v1456 = vpop.xlane.xlu0 %1455
  %v1457 = vsub.f32 %v1409, %v1426
  %v1458 = vsub.f32 %v1410, %v1428
  %v1459 = vsub.f32 %v1411, %v1430
  %v1460 = vsub.f32 %v1412, %v1432
  %v1461 = vsub.f32 %v1413, %v1434
  %v1462 = vsub.f32 %v1414, %v1436
  %v1463 = vsub.f32 %v1415, %v1438
  %v1464 = vsub.f32 %v1416, %v1440
  %v1465 = vsub.f32 %v1417, %v1442
  %v1466 = vsub.f32 %v1418, %v1444
  %v1467 = vsub.f32 %v1419, %v1446
  %v1468 = vsub.f32 %v1420, %v1448
  %v1469 = vsub.f32 %v1421, %v1450
  %v1470 = vsub.f32 %v1422, %v1452
  %v1471 = vsub.f32 %v1423, %v1454
  %v1472 = vsub.f32 %v1424, %v1456
  %v1473 = vmul.f32 %v1457, 1.442695
  %v1474 = vpow.pop %v1473
  %v1475 = vmul.f32 %v1458, 1.442695
  %v1476 = vpow.pop %v1475
  %v1477 = vmul.f32 %v1459, 1.442695
  %v1478 = vpow.pop %v1477
  %v1479 = vmul.f32 %v1460, 1.442695
  %v1480 = vpow.pop %v1479
  %v1481 = vmul.f32 %v1461, 1.442695
  %v1482 = vpow.pop %v1481
  %v1483 = vmul.f32 %v1462, 1.442695
  %v1484 = vpow.pop %v1483
  %v1485 = vmul.f32 %v1463, 1.442695
  %v1486 = vpow.pop %v1485
  %v1487 = vmul.f32 %v1464, 1.442695
  %v1488 = vpow.pop %v1487
  %v1489 = vmul.f32 %v1465, 1.442695
  %v1490 = vpow.pop %v1489
  %v1491 = vmul.f32 %v1466, 1.442695
  %v1492 = vpow.pop %v1491
  %v1493 = vmul.f32 %v1467, 1.442695
  %v1494 = vpow.pop %v1493
  %v1495 = vmul.f32 %v1468, 1.442695
  %v1496 = vpow.pop %v1495
  %v1497 = vmul.f32 %v1469, 1.442695
  %v1498 = vpow.pop %v1497
  %v1499 = vmul.f32 %v1470, 1.442695
  %v1500 = vpow.pop %v1499
  %v1501 = vmul.f32 %v1471, 1.442695
  %v1502 = vpow.pop %v1501
  %v1503 = vmul.f32 %v1472, 1.442695
  %v1504 = vpow.pop %v1503
  %1505 = vadd.xlane.f32.xlu0 %v1474
  %v1506 = vpop.xlane.xlu0 %1505
  %1507 = vadd.xlane.f32.xlu0 %v1476
  %v1508 = vpop.xlane.xlu0 %1507
  %1509 = vadd.xlane.f32.xlu0 %v1478
  %v1510 = vpop.xlane.xlu0 %1509
  %1511 = vadd.xlane.f32.xlu0 %v1480
  %v1512 = vpop.xlane.xlu0 %1511
  %1513 = vadd.xlane.f32.xlu0 %v1482
  %v1514 = vpop.xlane.xlu0 %1513
  %1515 = vadd.xlane.f32.xlu0 %v1484
  %v1516 = vpop.xlane.xlu0 %1515
  %1517 = vadd.xlane.f32.xlu0 %v1486
  %v1518 = vpop.xlane.xlu0 %1517
  %1519 = vadd.xlane.f32.xlu0 %v1488
  %v1520 = vpop.xlane.xlu0 %1519
  %1521 = vadd.xlane.f32.xlu0 %v1490
  %v1522 = vpop.xlane.xlu0 %1521
  %1523 = vadd.xlane.f32.xlu0 %v1492
  %v1524 = vpop.xlane.xlu0 %1523
  %1525 = vadd.xlane.f32.xlu0 %v1494
  %v1526 = vpop.xlane.xlu0 %1525
  %1527 = vadd.xlane.f32.xlu0 %v1496
  %v1528 = vpop.xlane.xlu0 %1527
  %1529 = vadd.xlane.f32.xlu0 %v1498
  %v1530 = vpop.xlane.xlu0 %1529
  %1531 = vadd.xlane.f32.xlu0 %v1500
  %v1532 = vpop.xlane.xlu0 %1531
  %1533 = vadd.xlane.f32.xlu0 %v1502
  %v1534 = vpop.xlane.xlu0 %1533
  %1535 = vadd.xlane.f32.xlu0 %v1504
  %v1536 = vpop.xlane.xlu0 %1535
  %v1537 = vrcp.pop %v1506
  %v1538 = vmul.f32 %v1474, %v1537
  %v1539 = vrcp.pop %v1508
  %v1540 = vmul.f32 %v1476, %v1539
  %v1541 = vrcp.pop %v1510
  %v1542 = vmul.f32 %v1478, %v1541
  %v1543 = vrcp.pop %v1512
  %v1544 = vmul.f32 %v1480, %v1543
  %v1545 = vrcp.pop %v1514
  %v1546 = vmul.f32 %v1482, %v1545
  %v1547 = vrcp.pop %v1516
  %v1548 = vmul.f32 %v1484, %v1547
  %v1549 = vrcp.pop %v1518
  %v1550 = vmul.f32 %v1486, %v1549
  %v1551 = vrcp.pop %v1520
  %v1552 = vmul.f32 %v1488, %v1551
  %v1553 = vrcp.pop %v1522
  %v1554 = vmul.f32 %v1490, %v1553
  %v1555 = vrcp.pop %v1524
  %v1556 = vmul.f32 %v1492, %v1555
  %v1557 = vrcp.pop %v1526
  %v1558 = vmul.f32 %v1494, %v1557
  %v1559 = vrcp.pop %v1528
  %v1560 = vmul.f32 %v1496, %v1559
  %v1561 = vrcp.pop %v1530
  %v1562 = vmul.f32 %v1498, %v1561
  %v1563 = vrcp.pop %v1532
  %v1564 = vmul.f32 %v1500, %v1563
  %v1565 = vrcp.pop %v1534
  %v1566 = vmul.f32 %v1502, %v1565
  %v1567 = vrcp.pop %v1536
  %v1568 = vmul.f32 %v1504, %v1567
  %1585 = vrot.lane.b32.xlu0 %v172, 96
  %v1586 = vpop.permute.xlu0 %1585
  %1587 = vrot.lane.b32.xlu0 %v177, 96
  %v1588 = vpop.permute.xlu0 %1587
  %1589 = vrot.lane.b32.xlu0 %v182, 96
  %v1590 = vpop.permute.xlu0 %1589
  %1591 = vrot.lane.b32.xlu0 %v187, 96
  %v1592 = vpop.permute.xlu0 %1591
  %1593 = vrot.lane.b32.xlu0 %v192, 96
  %v1594 = vpop.permute.xlu0 %1593
  %1595 = vrot.lane.b32.xlu0 %v197, 96
  %v1596 = vpop.permute.xlu0 %1595
  %1597 = vrot.lane.b32.xlu0 %v202, 96
  %v1598 = vpop.permute.xlu0 %1597
  %1599 = vrot.lane.b32.xlu0 %v207, 96
  %v1600 = vpop.permute.xlu0 %1599
  %1601 = vrot.lane.b32.xlu0 %v212, 96
  %v1602 = vpop.permute.xlu0 %1601
  %1603 = vrot.lane.b32.xlu0 %v217, 96
  %v1604 = vpop.permute.xlu0 %1603
  %1605 = vrot.lane.b32.xlu0 %v222, 96
  %v1606 = vpop.permute.xlu0 %1605
  %1607 = vrot.lane.b32.xlu0 %v227, 96
  %v1608 = vpop.permute.xlu0 %1607
  %1609 = vrot.lane.b32.xlu0 %v232, 96
  %v1610 = vpop.permute.xlu0 %1609
  %1611 = vrot.lane.b32.xlu0 %v237, 96
  %v1612 = vpop.permute.xlu0 %1611
  %1613 = vrot.lane.b32.xlu0 %v242, 96
  %v1614 = vpop.permute.xlu0 %1613
  %1615 = vrot.lane.b32.xlu0 %v247, 96
  %v1616 = vpop.permute.xlu0 %1615
  %1633 = vmatprep.subr.mxu0 0.0
  %1634 = vmatpush1.msra.mxu0 %v1586
  %1635 = vmatprep.subr.mxu0 0.0
  %1636 = vmatpush1.msra.mxu0 %v1588
  %1637 = vmatprep.subr.mxu0 0.0
  %1638 = vmatpush1.msra.mxu0 %v1590
  %1639 = vmatprep.subr.mxu0 0.0
  %1640 = vmatpush1.msra.mxu0 %v1592
  %1641 = vmatprep.subr.mxu0 0.0
  %1642 = vmatpush1.msra.mxu0 %v1594
  %1643 = vmatprep.subr.mxu0 0.0
  %1644 = vmatpush1.msra.mxu0 %v1596
  %1645 = vmatprep.subr.mxu0 0.0
  %1646 = vmatpush1.msra.mxu0 %v1598
  %1647 = vmatprep.subr.mxu0 0.0
  %1648 = vmatpush1.msra.mxu0 %v1600
  %1649 = vmatprep.subr.mxu0 0.0
  %1650 = vmatpush1.msra.mxu0 %v1602
  %1651 = vmatprep.subr.mxu0 0.0
  %1652 = vmatpush1.msra.mxu0 %v1604
  %1653 = vmatprep.subr.mxu0 0.0
  %1654 = vmatpush1.msra.mxu0 %v1606
  %1655 = vmatprep.subr.mxu0 0.0
  %1656 = vmatpush1.msra.mxu0 %v1608
  %1657 = vmatprep.subr.mxu0 0.0
  %1658 = vmatpush1.msra.mxu0 %v1610
  %1659 = vmatprep.subr.mxu0 0.0
  %1660 = vmatpush1.msra.mxu0 %v1612
  %1661 = vmatprep.subr.mxu0 0.0
  %1662 = vmatpush1.msra.mxu0 %v1614
  %1663 = vmatprep.subr.mxu0 0.0
  %1664 = vmatpush1.msra.mxu0 %v1616
  %1665 = vmatprep.subr.mxu0 0.0
  %1666 = vmatpush1.msra.mxu0 0.0
  %1667 = vmatprep.subr.mxu0 0.0
  %1668 = vmatpush1.msra.mxu0 0.0
  %1669 = vmatprep.subr.mxu0 0.0
  %1670 = vmatpush1.msra.mxu0 0.0
  %1671 = vmatprep.subr.mxu0 0.0
  %1672 = vmatpush1.msra.mxu0 0.0
  %1673 = vmatprep.subr.mxu0 0.0
  %1674 = vmatpush1.msra.mxu0 0.0
  %1675 = vmatprep.subr.mxu0 0.0
  %1676 = vmatpush1.msra.mxu0 0.0
  %1677 = vmatprep.subr.mxu0 0.0
  %1678 = vmatpush1.msra.mxu0 0.0
  %1679 = vmatprep.subr.mxu0 0.0
  %1680 = vmatpush1.msra.mxu0 0.0
  %1681 = vmatprep.subr.mxu0 0.0
  %1682 = vmatpush1.msra.mxu0 0.0
  %1683 = vmatprep.subr.mxu0 0.0
  %1684 = vmatpush1.msra.mxu0 0.0
  %1685 = vmatprep.subr.mxu0 0.0
  %1686 = vmatpush1.msra.mxu0 0.0
  %1687 = vmatprep.subr.mxu0 0.0
  %1688 = vmatpush1.msra.mxu0 0.0
  %1689 = vmatprep.subr.mxu0 0.0
  %1690 = vmatpush1.msra.mxu0 0.0
  %1691 = vmatprep.subr.mxu0 0.0
  %1692 = vmatpush1.msra.mxu0 0.0
  %1693 = vmatprep.subr.mxu0 0.0
  %1694 = vmatpush1.msra.mxu0 0.0
  %1695 = vmatprep.subr.mxu0 0.0
  %1696 = vmatpush1.msra.mxu0 0.0
  %1697 = vmatprep.mubr.f32.mxu0 0.0
  %1698 = vmatmul.mubr.f32.gmra.mrb[0].mxu0 %v1538
  %v1699 = vpop.f32.mrb[0].mxu0
  %v1700 = vadd.f32 0.0, %v1699
  %v1701 = vpop.f32.mrb[0].mxu0
  %1702 = vmatprep.mubr.f32.mxu0 0.0
  %1703 = vmatmul.mubr.f32.gmra.mrb[0].mxu0 %v1540
  %v1704 = vpop.f32.mrb[0].mxu0
  %v1705 = vadd.f32 0.0, %v1704
  %v1706 = vpop.f32.mrb[0].mxu0
  %1707 = vmatprep.mubr.f32.mxu0 0.0
  %1708 = vmatmul.mubr.f32.gmra.mrb[0].mxu0 %v1542
  %v1709 = vpop.f32.mrb[0].mxu0
  %v1710 = vadd.f32 0.0, %v1709
  %v1711 = vpop.f32.mrb[0].mxu0
  %1712 = vmatprep.mubr.f32.mxu0 0.0
  %1713 = vmatmul.mubr.f32.gmra.mrb[0].mxu0 %v1544
  %v1714 = vpop.f32.mrb[0].mxu0
  %v1715 = vadd.f32 0.0, %v1714
  %v1716 = vpop.f32.mrb[0].mxu0
  %1717 = vmatprep.mubr.f32.mxu0 0.0
  %1718 = vmatmul.mubr.f32.gmra.mrb[0].mxu0 %v1546
  %v1719 = vpop.f32.mrb[0].mxu0
  %v1720 = vadd.f32 0.0, %v1719
  %v1721 = vpop.f32.mrb[0].mxu0
  %1722 = vmatprep.mubr.f32.mxu0 0.0
  %1723 = vmatmul.mubr.f32.gmra.mrb[0].mxu0 %v1548
  %v1724 = vpop.f32.mrb[0].mxu0
  %v1725 = vadd.f32 0.0, %v1724
  %v1726 = vpop.f32.mrb[0].mxu0
  %1727 = vmatprep.mubr.f32.mxu0 0.0
  %1728 = vmatmul.mubr.f32.gmra.mrb[0].mxu0 %v1550
  %v1729 = vpop.f32.mrb[0].mxu0
  %v1730 = vadd.f32 0.0, %v1729
  %v1731 = vpop.f32.mrb[0].mxu0
  %1732 = vmatprep.mubr.f32.mxu0 0.0
  %1733 = vmatmul.mubr.f32.gmra.mrb[0].mxu0 %v1552
  %v1734 = vpop.f32.mrb[0].mxu0
  %v1735 = vadd.f32 0.0, %v1734
  %v1736 = vpop.f32.mrb[0].mxu0
  %1737 = vmatprep.mubr.f32.mxu0 0.0
  %1738 = vmatmul.mubr.f32.gmra.mrb[0].mxu0 %v1554
  %v1739 = vpop.f32.mrb[0].mxu0
  %v1740 = vadd.f32 0.0, %v1739
  %v1741 = vpop.f32.mrb[0].mxu0
  %1742 = vmatprep.mubr.f32.mxu0 0.0
  %1743 = vmatmul.mubr.f32.gmra.mrb[0].mxu0 %v1556
  %v1744 = vpop.f32.mrb[0].mxu0
  %v1745 = vadd.f32 0.0, %v1744
  %v1746 = vpop.f32.mrb[0].mxu0
  %1747 = vmatprep.mubr.f32.mxu0 0.0
  %1748 = vmatmul.mubr.f32.gmra.mrb[0].mxu0 %v1558
  %v1749 = vpop.f32.mrb[0].mxu0
  %v1750 = vadd.f32 0.0, %v1749
  %v1751 = vpop.f32.mrb[0].mxu0
  %1752 = vmatprep.mubr.f32.mxu0 0.0
  %1753 = vmatmul.mubr.f32.gmra.mrb[0].mxu0 %v1560
  %v1754 = vpop.f32.mrb[0].mxu0
  %v1755 = vadd.f32 0.0, %v1754
  %v1756 = vpop.f32.mrb[0].mxu0
  %1757 = vmatprep.mubr.f32.mxu0 0.0
  %1758 = vmatmul.mubr.f32.gmra.mrb[0].mxu0 %v1562
  %v1759 = vpop.f32.mrb[0].mxu0
  %v1760 = vadd.f32 0.0, %v1759
  %v1761 = vpop.f32.mrb[0].mxu0
  %1762 = vmatprep.mubr.f32.mxu0 0.0
  %1763 = vmatmul.mubr.f32.gmra.mrb[0].mxu0 %v1564
  %v1764 = vpop.f32.mrb[0].mxu0
  %v1765 = vadd.f32 0.0, %v1764
  %v1766 = vpop.f32.mrb[0].mxu0
  %1767 = vmatprep.mubr.f32.mxu0 0.0
  %1768 = vmatmul.mubr.f32.gmra.mrb[0].mxu0 %v1566
  %v1769 = vpop.f32.mrb[0].mxu0
  %v1770 = vadd.f32 0.0, %v1769
  %v1771 = vpop.f32.mrb[0].mxu0
  %1772 = vmatprep.mubr.f32.mxu0 0.0
  %1773 = vmatmul.mubr.f32.gmra.mrb[0].mxu0 %v1568
  %v1774 = vpop.f32.mrb[0].mxu0
  %v1775 = vadd.f32 0.0, %v1774
  %v1776 = vpop.f32.mrb[0].mxu0
  %1777 = vdwg.mxu0
  %1794 = vrot.lane.b32.xlu0 %v1700, 32
  %v1795 = vpop.permute.xlu0 %1794
  %1796 = vrot.lane.b32.xlu0 %v1705, 32
  %v1797 = vpop.permute.xlu0 %1796
  %1798 = vrot.lane.b32.xlu0 %v1710, 32
  %v1799 = vpop.permute.xlu0 %1798
  %1800 = vrot.lane.b32.xlu0 %v1715, 32
  %v1801 = vpop.permute.xlu0 %1800
  %1802 = vrot.lane.b32.xlu0 %v1720, 32
  %v1803 = vpop.permute.xlu0 %1802
  %1804 = vrot.lane.b32.xlu0 %v1725, 32
  %v1805 = vpop.permute.xlu0 %1804
  %1806 = vrot.lane.b32.xlu0 %v1730, 32
  %v1807 = vpop.permute.xlu0 %1806
  %1808 = vrot.lane.b32.xlu0 %v1735, 32
  %v1809 = vpop.permute.xlu0 %1808
  %1810 = vrot.lane.b32.xlu0 %v1740, 32
  %v1811 = vpop.permute.xlu0 %1810
  %1812 = vrot.lane.b32.xlu0 %v1745, 32
  %v1813 = vpop.permute.xlu0 %1812
  %1814 = vrot.lane.b32.xlu0 %v1750, 32
  %v1815 = vpop.permute.xlu0 %1814
  %1816 = vrot.lane.b32.xlu0 %v1755, 32
  %v1817 = vpop.permute.xlu0 %1816
  %1818 = vrot.lane.b32.xlu0 %v1760, 32
  %v1819 = vpop.permute.xlu0 %1818
  %1820 = vrot.lane.b32.xlu0 %v1765, 32
  %v1821 = vpop.permute.xlu0 %1820
  %1822 = vrot.lane.b32.xlu0 %v1770, 32
  %v1823 = vpop.permute.xlu0 %1822
  %1824 = vrot.lane.b32.xlu0 %v1775, 32
  %v1825 = vpop.permute.xlu0 %1824
  %vm1842 = vcmask 261120
  %v1843 = vsel %vm1842, %v946, %v1795
  %v1844 = vsel %vm1842, %v951, %v1797
  %v1845 = vsel %vm1842, %v956, %v1799
  %v1846 = vsel %vm1842, %v961, %v1801
  %v1847 = vsel %vm1842, %v966, %v1803
  %v1848 = vsel %vm1842, %v971, %v1805
  %v1849 = vsel %vm1842, %v976, %v1807
  %v1850 = vsel %vm1842, %v981, %v1809
  %v1851 = vsel %vm1842, %v986, %v1811
  %v1852 = vsel %vm1842, %v991, %v1813
  %v1853 = vsel %vm1842, %v996, %v1815
  %v1854 = vsel %vm1842, %v1001, %v1817
  %v1855 = vsel %vm1842, %v1006, %v1819
  %v1856 = vsel %vm1842, %v1011, %v1821
  %v1857 = vsel %vm1842, %v1016, %v1823
  %v1858 = vsel %vm1842, %v1021, %v1825
  %vm1859 = vcmp.gt.f32.partialorder %v1843, 0.0
  %vm1860 = vcmp.gt.f32.partialorder %v1844, 0.0
  %vm1861 = vcmp.gt.f32.partialorder %v1845, 0.0
  %vm1862 = vcmp.gt.f32.partialorder %v1846, 0.0
  %vm1863 = vcmp.gt.f32.partialorder %v1847, 0.0
  %vm1864 = vcmp.gt.f32.partialorder %v1848, 0.0
  %vm1865 = vcmp.gt.f32.partialorder %v1849, 0.0
  %vm1866 = vcmp.gt.f32.partialorder %v1850, 0.0
  %vm1867 = vcmp.gt.f32.partialorder %v1851, 0.0
  %vm1868 = vcmp.gt.f32.partialorder %v1852, 0.0
  %vm1869 = vcmp.gt.f32.partialorder %v1853, 0.0
  %vm1870 = vcmp.gt.f32.partialorder %v1854, 0.0
  %vm1871 = vcmp.gt.f32.partialorder %v1855, 0.0
  %vm1872 = vcmp.gt.f32.partialorder %v1856, 0.0
  %vm1873 = vcmp.gt.f32.partialorder %v1857, 0.0
  %vm1874 = vcmp.gt.f32.partialorder %v1858, 0.0
  %v1875 = vmul.f32 %v1843, 1.442695
  %v1876 = vpow.pop %v1875
  %v1877 = vmul.f32 %v1844, 1.442695
  %v1878 = vpow.pop %v1877
  %v1879 = vmul.f32 %v1845, 1.442695
  %v1880 = vpow.pop %v1879
  %v1881 = vmul.f32 %v1846, 1.442695
  %v1882 = vpow.pop %v1881
  %v1883 = vmul.f32 %v1847, 1.442695
  %v1884 = vpow.pop %v1883
  %v1885 = vmul.f32 %v1848, 1.442695
  %v1886 = vpow.pop %v1885
  %v1887 = vmul.f32 %v1849, 1.442695
  %v1888 = vpow.pop %v1887
  %v1889 = vmul.f32 %v1850, 1.442695
  %v1890 = vpow.pop %v1889
  %v1891 = vmul.f32 %v1851, 1.442695
  %v1892 = vpow.pop %v1891
  %v1893 = vmul.f32 %v1852, 1.442695
  %v1894 = vpow.pop %v1893
  %v1895 = vmul.f32 %v1853, 1.442695
  %v1896 = vpow.pop %v1895
  %v1897 = vmul.f32 %v1854, 1.442695
  %v1898 = vpow.pop %v1897
  %v1899 = vmul.f32 %v1855, 1.442695
  %v1900 = vpow.pop %v1899
  %v1901 = vmul.f32 %v1856, 1.442695
  %v1902 = vpow.pop %v1901
  %v1903 = vmul.f32 %v1857, 1.442695
  %v1904 = vpow.pop %v1903
  %v1905 = vmul.f32 %v1858, 1.442695
  %v1906 = vpow.pop %v1905
  %v1907 = vsub.f32 %v1876, 1.0
  %v1908 = vsub.f32 %v1878, 1.0
  %v1909 = vsub.f32 %v1880, 1.0
  %v1910 = vsub.f32 %v1882, 1.0
  %v1911 = vsub.f32 %v1884, 1.0
  %v1912 = vsub.f32 %v1886, 1.0
  %v1913 = vsub.f32 %v1888, 1.0
  %v1914 = vsub.f32 %v1890, 1.0
  %v1915 = vsub.f32 %v1892, 1.0
  %v1916 = vsub.f32 %v1894, 1.0
  %v1917 = vsub.f32 %v1896, 1.0
  %v1918 = vsub.f32 %v1898, 1.0
  %v1919 = vsub.f32 %v1900, 1.0
  %v1920 = vsub.f32 %v1902, 1.0
  %v1921 = vsub.f32 %v1904, 1.0
  %v1922 = vsub.f32 %v1906, 1.0
  %v1923 = vmul.f32 %v1907, 1.442695
  %v1924 = vpow.pop %v1923
  %v1925 = vmul.f32 %v1908, 1.442695
  %v1926 = vpow.pop %v1925
  %v1927 = vmul.f32 %v1909, 1.442695
  %v1928 = vpow.pop %v1927
  %v1929 = vmul.f32 %v1910, 1.442695
  %v1930 = vpow.pop %v1929
  %v1931 = vmul.f32 %v1911, 1.442695
  %v1932 = vpow.pop %v1931
  %v1933 = vmul.f32 %v1912, 1.442695
  %v1934 = vpow.pop %v1933
  %v1935 = vmul.f32 %v1913, 1.442695
  %v1936 = vpow.pop %v1935
  %v1937 = vmul.f32 %v1914, 1.442695
  %v1938 = vpow.pop %v1937
  %v1939 = vmul.f32 %v1915, 1.442695
  %v1940 = vpow.pop %v1939
  %v1941 = vmul.f32 %v1916, 1.442695
  %v1942 = vpow.pop %v1941
  %v1943 = vmul.f32 %v1917, 1.442695
  %v1944 = vpow.pop %v1943
  %v1945 = vmul.f32 %v1918, 1.442695
  %v1946 = vpow.pop %v1945
  %v1947 = vmul.f32 %v1919, 1.442695
  %v1948 = vpow.pop %v1947
  %v1949 = vmul.f32 %v1920, 1.442695
  %v1950 = vpow.pop %v1949
  %v1951 = vmul.f32 %v1921, 1.442695
  %v1952 = vpow.pop %v1951
  %v1953 = vmul.f32 %v1922, 1.442695
  %v1954 = vpow.pop %v1953
  %v1955 = vsub.f32 %v1924, 1.0
  %v1956 = vsub.f32 %v1926, 1.0
  %v1957 = vsub.f32 %v1928, 1.0
  %v1958 = vsub.f32 %v1930, 1.0
  %v1959 = vsub.f32 %v1932, 1.0
  %v1960 = vsub.f32 %v1934, 1.0
  %v1961 = vsub.f32 %v1936, 1.0
  %v1962 = vsub.f32 %v1938, 1.0
  %v1963 = vsub.f32 %v1940, 1.0
  %v1964 = vsub.f32 %v1942, 1.0
  %v1965 = vsub.f32 %v1944, 1.0
  %v1966 = vsub.f32 %v1946, 1.0
  %v1967 = vsub.f32 %v1948, 1.0
  %v1968 = vsub.f32 %v1950, 1.0
  %v1969 = vsub.f32 %v1952, 1.0
  %v1970 = vsub.f32 %v1954, 1.0
  %v1971 = vsel %vm1859, %v1843, %v1955
  %v1972 = vsel %vm1860, %v1844, %v1956
  %v1973 = vsel %vm1861, %v1845, %v1957
  %v1974 = vsel %vm1862, %v1846, %v1958
  %v1975 = vsel %vm1863, %v1847, %v1959
  %v1976 = vsel %vm1864, %v1848, %v1960
  %v1977 = vsel %vm1865, %v1849, %v1961
  %v1978 = vsel %vm1866, %v1850, %v1962
  %v1979 = vsel %vm1867, %v1851, %v1963
  %v1980 = vsel %vm1868, %v1852, %v1964
  %v1981 = vsel %vm1869, %v1853, %v1965
  %v1982 = vsel %vm1870, %v1854, %v1966
  %v1983 = vsel %vm1871, %v1855, %v1967
  %v1984 = vsel %vm1872, %v1856, %v1968
  %v1985 = vsel %vm1873, %v1857, %v1969
  %v1986 = vsel %vm1874, %v1858, %v1970
  %v1987 = vld [vmem:[%s4] sm:$0xff]
  %v1988 = vld [vmem:[%s4 + $0x8] sm:$0xff]
  %v1989 = vld [vmem:[%s4 + $0x10] sm:$0xff]
  %v1990 = vld [vmem:[%s4 + $0x18] sm:$0xff]
  %v1991 = vld [vmem:[%s4 + $0x20] sm:$0xff]
  %v1992 = vld [vmem:[%s4 + $0x28] sm:$0xff]
  %v1993 = vld [vmem:[%s4 + $0x30] sm:$0xff]
  %v1994 = vld [vmem:[%s4 + $0x38] sm:$0xff]
  %vm1995 = vcmask 523264
  %v1997 = vsel %vm1995, %v1971, 0
  %v2000 = vsel %vm1995, %v1972, 0
  %v2003 = vsel %vm1995, %v1973, 0
  %v2006 = vsel %vm1995, %v1974, 0
  %v2009 = vsel %vm1995, %v1975, 0
  %v2012 = vsel %vm1995, %v1976, 0
  %v2015 = vsel %vm1995, %v1977, 0
  %v2018 = vsel %vm1995, %v1978, 0
  %v2021 = vsel %vm1995, %v1979, 0
  %v2024 = vsel %vm1995, %v1980, 0
  %v2027 = vsel %vm1995, %v1981, 0
  %v2030 = vsel %vm1995, %v1982, 0
  %v2033 = vsel %vm1995, %v1983, 0
  %v2036 = vsel %vm1995, %v1984, 0
  %v2039 = vsel %vm1995, %v1985, 0
  %v2042 = vsel %vm1995, %v1986, 0
  %2044 = vmatprep.subr.mxu0 0.0
  %2045 = vmatpush1.msra.mxu0 %v1987
  %2046 = vmatprep.subr.mxu0 0.0
  %2047 = vmatpush1.msra.mxu0 %v1988
  %2048 = vmatprep.subr.mxu0 0.0
  %2049 = vmatpush1.msra.mxu0 %v1989
  %2050 = vmatprep.subr.mxu0 0.0
  %2051 = vmatpush1.msra.mxu0 %v1990
  %2052 = vmatprep.subr.mxu0 0.0
  %2053 = vmatpush1.msra.mxu0 %v1991
  %2054 = vmatprep.subr.mxu0 0.0
  %2055 = vmatpush1.msra.mxu0 %v1992
  %2056 = vmatprep.subr.mxu0 0.0
  %2057 = vmatpush1.msra.mxu0 %v1993
  %2058 = vmatprep.subr.mxu0 0.0
  %2059 = vmatpush1.msra.mxu0 %v1994
  %2060 = vmatprep.subr.mxu0 0.0
  %2061 = vmatpush1.msra.mxu0 0.0
  %2062 = vmatprep.subr.mxu0 0.0
  %2063 = vmatpush1.msra.mxu0 0.0
  %2064 = vmatprep.subr.mxu0 0.0
  %2065 = vmatpush1.msra.mxu0 0.0
  %2066 = vmatprep.subr.mxu0 0.0
  %2067 = vmatpush1.msra.mxu0 0.0
  %2068 = vmatprep.subr.mxu0 0.0
  %2069 = vmatpush1.msra.mxu0 0.0
  %2070 = vmatprep.subr.mxu0 0.0
  %2071 = vmatpush1.msra.mxu0 0.0
  %2072 = vmatprep.subr.mxu0 0.0
  %2073 = vmatpush1.msra.mxu0 0.0
  %2074 = vmatprep.subr.mxu0 0.0
  %2075 = vmatpush1.msra.mxu0 0.0
  %2076 = vmatprep.subr.mxu0 0.0
  %2077 = vmatpush1.msra.mxu0 0.0
  %2078 = vmatprep.subr.mxu0 0.0
  %2079 = vmatpush1.msra.mxu0 0.0
  %2080 = vmatprep.subr.mxu0 0.0
  %2081 = vmatpush1.msra.mxu0 0.0
  %2082 = vmatprep.subr.mxu0 0.0
  %2083 = vmatpush1.msra.mxu0 0.0
  %2084 = vmatprep.subr.mxu0 0.0
  %2085 = vmatpush1.msra.mxu0 0.0
  %2086 = vmatprep.subr.mxu0 0.0
  %2087 = vmatpush1.msra.mxu0 0.0
  %2088 = vmatprep.subr.mxu0 0.0
  %2089 = vmatpush1.msra.mxu0 0.0
  %2090 = vmatprep.subr.mxu0 0.0
  %2091 = vmatpush1.msra.mxu0 0.0
  %2092 = vmatprep.subr.mxu0 0.0
  %2093 = vmatpush1.msra.mxu0 0.0
  %2094 = vmatprep.subr.mxu0 0.0
  %2095 = vmatpush1.msra.mxu0 0.0
  %2096 = vmatprep.subr.mxu0 0.0
  %2097 = vmatpush1.msra.mxu0 0.0
  %2098 = vmatprep.subr.mxu0 0.0
  %2099 = vmatpush1.msra.mxu0 0.0
  %2100 = vmatprep.subr.mxu0 0.0
  %2101 = vmatpush1.msra.mxu0 0.0
  %2102 = vmatprep.subr.mxu0 0.0
  %2103 = vmatpush1.msra.mxu0 0.0
  %2104 = vmatprep.subr.mxu0 0.0
  %2105 = vmatpush1.msra.mxu0 0.0
  %2106 = vmatprep.subr.mxu0 0.0
  %2107 = vmatpush1.msra.mxu0 0.0
  %2108 = vmatprep.mubr.f32.mxu0 0.0
  %2109 = vmatmul.mubr.f32.gmra.mrb[0].mxu0 %v1997
  %v2110 = vpop.f32.mrb[0].mxu0
  %v2111 = vadd.f32 0.0, %v2110
  %v2112 = vpop.f32.mrb[0].mxu0
  %2113 = vmatprep.mubr.f32.mxu0 0.0
  %2114 = vmatmul.mubr.f32.gmra.mrb[0].mxu0 %v2000
  %v2115 = vpop.f32.mrb[0].mxu0
  %v2116 = vadd.f32 0.0, %v2115
  %v2117 = vpop.f32.mrb[0].mxu0
  %2118 = vmatprep.mubr.f32.mxu0 0.0
  %2119 = vmatmul.mubr.f32.gmra.mrb[0].mxu0 %v2003
  %v2120 = vpop.f32.mrb[0].mxu0
  %v2121 = vadd.f32 0.0, %v2120
  %v2122 = vpop.f32.mrb[0].mxu0
  %2123 = vmatprep.mubr.f32.mxu0 0.0
  %2124 = vmatmul.mubr.f32.gmra.mrb[0].mxu0 %v2006
  %v2125 = vpop.f32.mrb[0].mxu0
  %v2126 = vadd.f32 0.0, %v2125
  %v2127 = vpop.f32.mrb[0].mxu0
  %2128 = vmatprep.mubr.f32.mxu0 0.0
  %2129 = vmatmul.mubr.f32.gmra.mrb[0].mxu0 %v2009
  %v2130 = vpop.f32.mrb[0].mxu0
  %v2131 = vadd.f32 0.0, %v2130
  %v2132 = vpop.f32.mrb[0].mxu0
  %2133 = vmatprep.mubr.f32.mxu0 0.0
  %2134 = vmatmul.mubr.f32.gmra.mrb[0].mxu0 %v2012
  %v2135 = vpop.f32.mrb[0].mxu0
  %v2136 = vadd.f32 0.0, %v2135
  %v2137 = vpop.f32.mrb[0].mxu0
  %2138 = vmatprep.mubr.f32.mxu0 0.0
  %2139 = vmatmul.mubr.f32.gmra.mrb[0].mxu0 %v2015
  %v2140 = vpop.f32.mrb[0].mxu0
  %v2141 = vadd.f32 0.0, %v2140
  %v2142 = vpop.f32.mrb[0].mxu0
  %2143 = vmatprep.mubr.f32.mxu0 0.0
  %2144 = vmatmul.mubr.f32.gmra.mrb[0].mxu0 %v2018
  %v2145 = vpop.f32.mrb[0].mxu0
  %v2146 = vadd.f32 0.0, %v2145
  %v2147 = vpop.f32.mrb[0].mxu0
  %2148 = vmatprep.mubr.f32.mxu0 0.0
  %2149 = vmatmul.mubr.f32.gmra.mrb[0].mxu0 %v2021
  %v2150 = vpop.f32.mrb[0].mxu0
  %v2151 = vadd.f32 0.0, %v2150
  %v2152 = vpop.f32.mrb[0].mxu0
  %2153 = vmatprep.mubr.f32.mxu0 0.0
  %2154 = vmatmul.mubr.f32.gmra.mrb[0].mxu0 %v2024
  %v2155 = vpop.f32.mrb[0].mxu0
  %v2156 = vadd.f32 0.0, %v2155
  %v2157 = vpop.f32.mrb[0].mxu0
  %2158 = vmatprep.mubr.f32.mxu0 0.0
  %2159 = vmatmul.mubr.f32.gmra.mrb[0].mxu0 %v2027
  %v2160 = vpop.f32.mrb[0].mxu0
  %v2161 = vadd.f32 0.0, %v2160
  %v2162 = vpop.f32.mrb[0].mxu0
  %2163 = vmatprep.mubr.f32.mxu0 0.0
  %2164 = vmatmul.mubr.f32.gmra.mrb[0].mxu0 %v2030
  %v2165 = vpop.f32.mrb[0].mxu0
  %v2166 = vadd.f32 0.0, %v2165
  %v2167 = vpop.f32.mrb[0].mxu0
  %2168 = vmatprep.mubr.f32.mxu0 0.0
  %2169 = vmatmul.mubr.f32.gmra.mrb[0].mxu0 %v2033
  %v2170 = vpop.f32.mrb[0].mxu0
  %v2171 = vadd.f32 0.0, %v2170
  %v2172 = vpop.f32.mrb[0].mxu0
  %2173 = vmatprep.mubr.f32.mxu0 0.0
  %2174 = vmatmul.mubr.f32.gmra.mrb[0].mxu0 %v2036
  %v2175 = vpop.f32.mrb[0].mxu0
  %v2176 = vadd.f32 0.0, %v2175
  %v2177 = vpop.f32.mrb[0].mxu0
  %2178 = vmatprep.mubr.f32.mxu0 0.0
  %2179 = vmatmul.mubr.f32.gmra.mrb[0].mxu0 %v2039
  %v2180 = vpop.f32.mrb[0].mxu0
  %v2181 = vadd.f32 0.0, %v2180
  %v2182 = vpop.f32.mrb[0].mxu0
  %2183 = vmatprep.mubr.f32.mxu0 0.0
  %2184 = vmatmul.mubr.f32.gmra.mrb[0].mxu0 %v2042
  %v2185 = vpop.f32.mrb[0].mxu0
  %v2186 = vadd.f32 0.0, %v2185
  %v2187 = vpop.f32.mrb[0].mxu0
  %2188 = vdwg.mxu0
  %v2189 = vld [vmem:[%s5] sm:$0xff]
  %v2190 = vld [vmem:[%s5 + $0x8] sm:$0xff]
  %v2191 = vld [vmem:[%s5 + $0x10] sm:$0xff]
  %v2192 = vld [vmem:[%s5 + $0x18] sm:$0xff]
  %v2193 = vld [vmem:[%s5 + $0x20] sm:$0xff]
  %v2194 = vld [vmem:[%s5 + $0x28] sm:$0xff]
  %v2195 = vld [vmem:[%s5 + $0x30] sm:$0xff]
  %v2196 = vld [vmem:[%s5 + $0x38] sm:$0xff]
  %2197 = vmatprep.subr.mxu0 0.0
  %2198 = vmatpush1.msra.mxu0 %v2189
  %2199 = vmatprep.subr.mxu0 0.0
  %2200 = vmatpush1.msra.mxu0 %v2190
  %2201 = vmatprep.subr.mxu0 0.0
  %2202 = vmatpush1.msra.mxu0 %v2191
  %2203 = vmatprep.subr.mxu0 0.0
  %2204 = vmatpush1.msra.mxu0 %v2192
  %2205 = vmatprep.subr.mxu0 0.0
  %2206 = vmatpush1.msra.mxu0 %v2193
  %2207 = vmatprep.subr.mxu0 0.0
  %2208 = vmatpush1.msra.mxu0 %v2194
  %2209 = vmatprep.subr.mxu0 0.0
  %2210 = vmatpush1.msra.mxu0 %v2195
  %2211 = vmatprep.subr.mxu0 0.0
  %2212 = vmatpush1.msra.mxu0 %v2196
  %2213 = vmatprep.subr.mxu0 0.0
  %2214 = vmatpush1.msra.mxu0 0.0
  %2215 = vmatprep.subr.mxu0 0.0
  %2216 = vmatpush1.msra.mxu0 0.0
  %2217 = vmatprep.subr.mxu0 0.0
  %2218 = vmatpush1.msra.mxu0 0.0
  %2219 = vmatprep.subr.mxu0 0.0
  %2220 = vmatpush1.msra.mxu0 0.0
  %2221 = vmatprep.subr.mxu0 0.0
  %2222 = vmatpush1.msra.mxu0 0.0
  %2223 = vmatprep.subr.mxu0 0.0
  %2224 = vmatpush1.msra.mxu0 0.0
  %2225 = vmatprep.subr.mxu0 0.0
  %2226 = vmatpush1.msra.mxu0 0.0
  %2227 = vmatprep.subr.mxu0 0.0
  %2228 = vmatpush1.msra.mxu0 0.0
  %2229 = vmatprep.subr.mxu0 0.0
  %2230 = vmatpush1.msra.mxu0 0.0
  %2231 = vmatprep.subr.mxu0 0.0
  %2232 = vmatpush1.msra.mxu0 0.0
  %2233 = vmatprep.subr.mxu0 0.0
  %2234 = vmatpush1.msra.mxu0 0.0
  %2235 = vmatprep.subr.mxu0 0.0
  %2236 = vmatpush1.msra.mxu0 0.0
  %2237 = vmatprep.subr.mxu0 0.0
  %2238 = vmatpush1.msra.mxu0 0.0
  %2239 = vmatprep.subr.mxu0 0.0
  %2240 = vmatpush1.msra.mxu0 0.0
  %2241 = vmatprep.subr.mxu0 0.0
  %2242 = vmatpush1.msra.mxu0 0.0
  %2243 = vmatprep.subr.mxu0 0.0
  %2244 = vmatpush1.msra.mxu0 0.0
  %2245 = vmatprep.subr.mxu0 0.0
  %2246 = vmatpush1.msra.mxu0 0.0
  %2247 = vmatprep.subr.mxu0 0.0
  %2248 = vmatpush1.msra.mxu0 0.0
  %2249 = vmatprep.subr.mxu0 0.0
  %2250 = vmatpush1.msra.mxu0 0.0
  %2251 = vmatprep.subr.mxu0 0.0
  %2252 = vmatpush1.msra.mxu0 0.0
  %2253 = vmatprep.subr.mxu0 0.0
  %2254 = vmatpush1.msra.mxu0 0.0
  %2255 = vmatprep.subr.mxu0 0.0
  %2256 = vmatpush1.msra.mxu0 0.0
  %2257 = vmatprep.subr.mxu0 0.0
  %2258 = vmatpush1.msra.mxu0 0.0
  %2259 = vmatprep.subr.mxu0 0.0
  %2260 = vmatpush1.msra.mxu0 0.0
  %2261 = vmatprep.mubr.f32.mxu0 0.0
  %2262 = vmatmul.mubr.f32.gmra.mrb[0].mxu0 %v1997
  %v2263 = vpop.f32.mrb[0].mxu0
  %v2264 = vadd.f32 0.0, %v2263
  %v2265 = vpop.f32.mrb[0].mxu0
  %2266 = vmatprep.mubr.f32.mxu0 0.0
  %2267 = vmatmul.mubr.f32.gmra.mrb[0].mxu0 %v2000
  %v2268 = vpop.f32.mrb[0].mxu0
  %v2269 = vadd.f32 0.0, %v2268
  %v2270 = vpop.f32.mrb[0].mxu0
  %2271 = vmatprep.mubr.f32.mxu0 0.0
  %2272 = vmatmul.mubr.f32.gmra.mrb[0].mxu0 %v2003
  %v2273 = vpop.f32.mrb[0].mxu0
  %v2274 = vadd.f32 0.0, %v2273
  %v2275 = vpop.f32.mrb[0].mxu0
  %2276 = vmatprep.mubr.f32.mxu0 0.0
  %2277 = vmatmul.mubr.f32.gmra.mrb[0].mxu0 %v2006
  %v2278 = vpop.f32.mrb[0].mxu0
  %v2279 = vadd.f32 0.0, %v2278
  %v2280 = vpop.f32.mrb[0].mxu0
  %2281 = vmatprep.mubr.f32.mxu0 0.0
  %2282 = vmatmul.mubr.f32.gmra.mrb[0].mxu0 %v2009
  %v2283 = vpop.f32.mrb[0].mxu0
  %v2284 = vadd.f32 0.0, %v2283
  %v2285 = vpop.f32.mrb[0].mxu0
  %2286 = vmatprep.mubr.f32.mxu0 0.0
  %2287 = vmatmul.mubr.f32.gmra.mrb[0].mxu0 %v2012
  %v2288 = vpop.f32.mrb[0].mxu0
  %v2289 = vadd.f32 0.0, %v2288
  %v2290 = vpop.f32.mrb[0].mxu0
  %2291 = vmatprep.mubr.f32.mxu0 0.0
  %2292 = vmatmul.mubr.f32.gmra.mrb[0].mxu0 %v2015
  %v2293 = vpop.f32.mrb[0].mxu0
  %v2294 = vadd.f32 0.0, %v2293
  %v2295 = vpop.f32.mrb[0].mxu0
  %2296 = vmatprep.mubr.f32.mxu0 0.0
  %2297 = vmatmul.mubr.f32.gmra.mrb[0].mxu0 %v2018
  %v2298 = vpop.f32.mrb[0].mxu0
  %v2299 = vadd.f32 0.0, %v2298
  %v2300 = vpop.f32.mrb[0].mxu0
  %2301 = vmatprep.mubr.f32.mxu0 0.0
  %2302 = vmatmul.mubr.f32.gmra.mrb[0].mxu0 %v2021
  %v2303 = vpop.f32.mrb[0].mxu0
  %v2304 = vadd.f32 0.0, %v2303
  %v2305 = vpop.f32.mrb[0].mxu0
  %2306 = vmatprep.mubr.f32.mxu0 0.0
  %2307 = vmatmul.mubr.f32.gmra.mrb[0].mxu0 %v2024
  %v2308 = vpop.f32.mrb[0].mxu0
  %v2309 = vadd.f32 0.0, %v2308
  %v2310 = vpop.f32.mrb[0].mxu0
  %2311 = vmatprep.mubr.f32.mxu0 0.0
  %2312 = vmatmul.mubr.f32.gmra.mrb[0].mxu0 %v2027
  %v2313 = vpop.f32.mrb[0].mxu0
  %v2314 = vadd.f32 0.0, %v2313
  %v2315 = vpop.f32.mrb[0].mxu0
  %2316 = vmatprep.mubr.f32.mxu0 0.0
  %2317 = vmatmul.mubr.f32.gmra.mrb[0].mxu0 %v2030
  %v2318 = vpop.f32.mrb[0].mxu0
  %v2319 = vadd.f32 0.0, %v2318
  %v2320 = vpop.f32.mrb[0].mxu0
  %2321 = vmatprep.mubr.f32.mxu0 0.0
  %2322 = vmatmul.mubr.f32.gmra.mrb[0].mxu0 %v2033
  %v2323 = vpop.f32.mrb[0].mxu0
  %v2324 = vadd.f32 0.0, %v2323
  %v2325 = vpop.f32.mrb[0].mxu0
  %2326 = vmatprep.mubr.f32.mxu0 0.0
  %2327 = vmatmul.mubr.f32.gmra.mrb[0].mxu0 %v2036
  %v2328 = vpop.f32.mrb[0].mxu0
  %v2329 = vadd.f32 0.0, %v2328
  %v2330 = vpop.f32.mrb[0].mxu0
  %2331 = vmatprep.mubr.f32.mxu0 0.0
  %2332 = vmatmul.mubr.f32.gmra.mrb[0].mxu0 %v2039
  %v2333 = vpop.f32.mrb[0].mxu0
  %v2334 = vadd.f32 0.0, %v2333
  %v2335 = vpop.f32.mrb[0].mxu0
  %2336 = vmatprep.mubr.f32.mxu0 0.0
  %2337 = vmatmul.mubr.f32.gmra.mrb[0].mxu0 %v2042
  %v2338 = vpop.f32.mrb[0].mxu0
  %v2339 = vadd.f32 0.0, %v2338
  %v2340 = vpop.f32.mrb[0].mxu0
  %2341 = vdwg.mxu0
  %v2342 = vsel %vm396, %v2264, 1.0
  %v2343 = vsel %vm396, %v2269, 1.0
  %v2344 = vsel %vm396, %v2274, 1.0
  %v2345 = vsel %vm396, %v2279, 1.0
  %v2346 = vsel %vm396, %v2284, 1.0
  %v2347 = vsel %vm396, %v2289, 1.0
  %v2348 = vsel %vm396, %v2294, 1.0
  %v2349 = vsel %vm396, %v2299, 1.0
  %v2350 = vsel %vm396, %v2304, 1.0
  %v2351 = vsel %vm396, %v2309, 1.0
  %v2352 = vsel %vm396, %v2314, 1.0
  %v2353 = vsel %vm396, %v2319, 1.0
  %v2354 = vsel %vm396, %v2324, 1.0
  %v2355 = vsel %vm396, %v2329, 1.0
  %v2356 = vsel %vm396, %v2334, 1.0
  %v2357 = vsel %vm396, %v2339, 1.0
  %v2358 = vsel %vm396, 1.0, %v2264
  %v2359 = vsel %vm396, 1.0, %v2269
  %v2360 = vsel %vm396, 1.0, %v2274
  %v2361 = vsel %vm396, 1.0, %v2279
  %v2362 = vsel %vm396, 1.0, %v2284
  %v2363 = vsel %vm396, 1.0, %v2289
  %v2364 = vsel %vm396, 1.0, %v2294
  %v2365 = vsel %vm396, 1.0, %v2299
  %v2366 = vsel %vm396, 1.0, %v2304
  %v2367 = vsel %vm396, 1.0, %v2309
  %v2368 = vsel %vm396, 1.0, %v2314
  %v2369 = vsel %vm396, 1.0, %v2319
  %v2370 = vsel %vm396, 1.0, %v2324
  %v2371 = vsel %vm396, 1.0, %v2329
  %v2372 = vsel %vm396, 1.0, %v2334
  %v2373 = vsel %vm396, 1.0, %v2339
  %v2375 = vsel %vm429, %v2342, 0
  %v2378 = vsel %vm429, %v2343, 0
  %v2381 = vsel %vm429, %v2344, 0
  %v2384 = vsel %vm429, %v2345, 0
  %v2387 = vsel %vm429, %v2346, 0
  %v2390 = vsel %vm429, %v2347, 0
  %v2393 = vsel %vm429, %v2348, 0
  %v2396 = vsel %vm429, %v2349, 0
  %v2399 = vsel %vm429, %v2350, 0
  %v2402 = vsel %vm429, %v2351, 0
  %v2405 = vsel %vm429, %v2352, 0
  %v2408 = vsel %vm429, %v2353, 0
  %v2411 = vsel %vm429, %v2354, 0
  %v2414 = vsel %vm429, %v2355, 0
  %v2417 = vsel %vm429, %v2356, 0
  %v2420 = vsel %vm429, %v2357, 0
  %v2423 = vsel %vm429, %v2358, 0
  %v2426 = vsel %vm429, %v2359, 0
  %v2429 = vsel %vm429, %v2360, 0
  %v2432 = vsel %vm429, %v2361, 0
  %v2435 = vsel %vm429, %v2362, 0
  %v2438 = vsel %vm429, %v2363, 0
  %v2441 = vsel %vm429, %v2364, 0
  %v2444 = vsel %vm429, %v2365, 0
  %v2447 = vsel %vm429, %v2366, 0
  %v2450 = vsel %vm429, %v2367, 0
  %v2453 = vsel %vm429, %v2368, 0
  %v2456 = vsel %vm429, %v2369, 0
  %v2459 = vsel %vm429, %v2370, 0
  %v2462 = vsel %vm429, %v2371, 0
  %v2465 = vsel %vm429, %v2372, 0
  %v2468 = vsel %vm429, %v2373, 0
  %2470 = vmatprep.subr.mxu0 0.0
  %2471 = vmatpush1.xpose.msra.mxu0 %v2423
  %2472 = vmatprep.subr.mxu0 0.0
  %2473 = vmatpush1.xpose.msra.mxu0 %v2426
  %2474 = vmatprep.subr.mxu0 0.0
  %2475 = vmatpush1.xpose.msra.mxu0 %v2429
  %2476 = vmatprep.subr.mxu0 0.0
  %2477 = vmatpush1.xpose.msra.mxu0 %v2432
  %2478 = vmatprep.subr.mxu0 0.0
  %2479 = vmatpush1.xpose.msra.mxu0 %v2435
  %2480 = vmatprep.subr.mxu0 0.0
  %2481 = vmatpush1.xpose.msra.mxu0 %v2438
  %2482 = vmatprep.subr.mxu0 0.0
  %2483 = vmatpush1.xpose.msra.mxu0 %v2441
  %2484 = vmatprep.subr.mxu0 0.0
  %2485 = vmatpush1.xpose.msra.mxu0 %v2444
  %2486 = vmatprep.subr.mxu0 0.0
  %2487 = vmatpush1.xpose.msra.mxu0 %v2447
  %2488 = vmatprep.subr.mxu0 0.0
  %2489 = vmatpush1.xpose.msra.mxu0 %v2450
  %2490 = vmatprep.subr.mxu0 0.0
  %2491 = vmatpush1.xpose.msra.mxu0 %v2453
  %2492 = vmatprep.subr.mxu0 0.0
  %2493 = vmatpush1.xpose.msra.mxu0 %v2456
  %2494 = vmatprep.subr.mxu0 0.0
  %2495 = vmatpush1.xpose.msra.mxu0 %v2459
  %2496 = vmatprep.subr.mxu0 0.0
  %2497 = vmatpush1.xpose.msra.mxu0 %v2462
  %2498 = vmatprep.subr.mxu0 0.0
  %2499 = vmatpush1.xpose.msra.mxu0 %v2465
  %2500 = vmatprep.subr.mxu0 0.0
  %2501 = vmatpush1.xpose.msra.mxu0 %v2468
  %2502 = vmatprep.subr.mxu0 0.0
  %2503 = vmatpush1.xpose.msra.mxu0 0.0
  %2504 = vmatprep.subr.mxu0 0.0
  %2505 = vmatpush1.xpose.msra.mxu0 0.0
  %2506 = vmatprep.subr.mxu0 0.0
  %2507 = vmatpush1.xpose.msra.mxu0 0.0
  %2508 = vmatprep.subr.mxu0 0.0
  %2509 = vmatpush1.xpose.msra.mxu0 0.0
  %2510 = vmatprep.subr.mxu0 0.0
  %2511 = vmatpush1.xpose.msra.mxu0 0.0
  %2512 = vmatprep.subr.mxu0 0.0
  %2513 = vmatpush1.xpose.msra.mxu0 0.0
  %2514 = vmatprep.subr.mxu0 0.0
  %2515 = vmatpush1.xpose.msra.mxu0 0.0
  %2516 = vmatprep.subr.mxu0 0.0
  %2517 = vmatpush1.xpose.msra.mxu0 0.0
  %2518 = vmatprep.subr.mxu0 0.0
  %2519 = vmatpush1.xpose.msra.mxu0 0.0
  %2520 = vmatprep.subr.mxu0 0.0
  %2521 = vmatpush1.xpose.msra.mxu0 0.0
  %2522 = vmatprep.subr.mxu0 0.0
  %2523 = vmatpush1.xpose.msra.mxu0 0.0
  %2524 = vmatprep.subr.mxu0 0.0
  %2525 = vmatpush1.xpose.msra.mxu0 0.0
  %2526 = vmatprep.subr.mxu0 0.0
  %2527 = vmatpush1.xpose.msra.mxu0 0.0
  %2528 = vmatprep.subr.mxu0 0.0
  %2529 = vmatpush1.xpose.msra.mxu0 0.0
  %2530 = vmatprep.subr.mxu0 0.0
  %2531 = vmatpush1.xpose.msra.mxu0 0.0
  %2532 = vmatprep.subr.mxu0 0.0
  %2533 = vmatpush1.xpose.msra.mxu0 0.0
  %2534 = vmatprep.mubr.f32.mxu0 0.0
  %2535 = vmatmul.mubr.f32.gmra.mrb[0].mxu0 %v2375
  %v2536 = vpop.f32.mrb[0].mxu0
  %v2537 = vadd.f32 0.0, %v2536
  %v2538 = vpop.f32.mrb[0].mxu0
  %2539 = vmatprep.mubr.f32.mxu0 0.0
  %2540 = vmatmul.mubr.f32.gmra.mrb[0].mxu0 %v2378
  %v2541 = vpop.f32.mrb[0].mxu0
  %v2542 = vadd.f32 0.0, %v2541
  %v2543 = vpop.f32.mrb[0].mxu0
  %2544 = vmatprep.mubr.f32.mxu0 0.0
  %2545 = vmatmul.mubr.f32.gmra.mrb[0].mxu0 %v2381
  %v2546 = vpop.f32.mrb[0].mxu0
  %v2547 = vadd.f32 0.0, %v2546
  %v2548 = vpop.f32.mrb[0].mxu0
  %2549 = vmatprep.mubr.f32.mxu0 0.0
  %2550 = vmatmul.mubr.f32.gmra.mrb[0].mxu0 %v2384
  %v2551 = vpop.f32.mrb[0].mxu0
  %v2552 = vadd.f32 0.0, %v2551
  %v2553 = vpop.f32.mrb[0].mxu0
  %2554 = vmatprep.mubr.f32.mxu0 0.0
  %2555 = vmatmul.mubr.f32.gmra.mrb[0].mxu0 %v2387
  %v2556 = vpop.f32.mrb[0].mxu0
  %v2557 = vadd.f32 0.0, %v2556
  %v2558 = vpop.f32.mrb[0].mxu0
  %2559 = vmatprep.mubr.f32.mxu0 0.0
  %2560 = vmatmul.mubr.f32.gmra.mrb[0].mxu0 %v2390
  %v2561 = vpop.f32.mrb[0].mxu0
  %v2562 = vadd.f32 0.0, %v2561
  %v2563 = vpop.f32.mrb[0].mxu0
  %2564 = vmatprep.mubr.f32.mxu0 0.0
  %2565 = vmatmul.mubr.f32.gmra.mrb[0].mxu0 %v2393
  %v2566 = vpop.f32.mrb[0].mxu0
  %v2567 = vadd.f32 0.0, %v2566
  %v2568 = vpop.f32.mrb[0].mxu0
  %2569 = vmatprep.mubr.f32.mxu0 0.0
  %2570 = vmatmul.mubr.f32.gmra.mrb[0].mxu0 %v2396
  %v2571 = vpop.f32.mrb[0].mxu0
  %v2572 = vadd.f32 0.0, %v2571
  %v2573 = vpop.f32.mrb[0].mxu0
  %2574 = vmatprep.mubr.f32.mxu0 0.0
  %2575 = vmatmul.mubr.f32.gmra.mrb[0].mxu0 %v2399
  %v2576 = vpop.f32.mrb[0].mxu0
  %v2577 = vadd.f32 0.0, %v2576
  %v2578 = vpop.f32.mrb[0].mxu0
  %2579 = vmatprep.mubr.f32.mxu0 0.0
  %2580 = vmatmul.mubr.f32.gmra.mrb[0].mxu0 %v2402
  %v2581 = vpop.f32.mrb[0].mxu0
  %v2582 = vadd.f32 0.0, %v2581
  %v2583 = vpop.f32.mrb[0].mxu0
  %2584 = vmatprep.mubr.f32.mxu0 0.0
  %2585 = vmatmul.mubr.f32.gmra.mrb[0].mxu0 %v2405
  %v2586 = vpop.f32.mrb[0].mxu0
  %v2587 = vadd.f32 0.0, %v2586
  %v2588 = vpop.f32.mrb[0].mxu0
  %2589 = vmatprep.mubr.f32.mxu0 0.0
  %2590 = vmatmul.mubr.f32.gmra.mrb[0].mxu0 %v2408
  %v2591 = vpop.f32.mrb[0].mxu0
  %v2592 = vadd.f32 0.0, %v2591
  %v2593 = vpop.f32.mrb[0].mxu0
  %2594 = vmatprep.mubr.f32.mxu0 0.0
  %2595 = vmatmul.mubr.f32.gmra.mrb[0].mxu0 %v2411
  %v2596 = vpop.f32.mrb[0].mxu0
  %v2597 = vadd.f32 0.0, %v2596
  %v2598 = vpop.f32.mrb[0].mxu0
  %2599 = vmatprep.mubr.f32.mxu0 0.0
  %2600 = vmatmul.mubr.f32.gmra.mrb[0].mxu0 %v2414
  %v2601 = vpop.f32.mrb[0].mxu0
  %v2602 = vadd.f32 0.0, %v2601
  %v2603 = vpop.f32.mrb[0].mxu0
  %2604 = vmatprep.mubr.f32.mxu0 0.0
  %2605 = vmatmul.mubr.f32.gmra.mrb[0].mxu0 %v2417
  %v2606 = vpop.f32.mrb[0].mxu0
  %v2607 = vadd.f32 0.0, %v2606
  %v2608 = vpop.f32.mrb[0].mxu0
  %2609 = vmatprep.mubr.f32.mxu0 0.0
  %2610 = vmatmul.mubr.f32.gmra.mrb[0].mxu0 %v2420
  %v2611 = vpop.f32.mrb[0].mxu0
  %v2612 = vadd.f32 0.0, %v2611
  %v2613 = vpop.f32.mrb[0].mxu0
  %2614 = vdwg.mxu0
  %vm2615 = vcmp.gt.f32.partialorder %v2537, 0.0
  %vm2616 = vcmp.gt.f32.partialorder %v2542, 0.0
  %vm2617 = vcmp.gt.f32.partialorder %v2547, 0.0
  %vm2618 = vcmp.gt.f32.partialorder %v2552, 0.0
  %vm2619 = vcmp.gt.f32.partialorder %v2557, 0.0
  %vm2620 = vcmp.gt.f32.partialorder %v2562, 0.0
  %vm2621 = vcmp.gt.f32.partialorder %v2567, 0.0
  %vm2622 = vcmp.gt.f32.partialorder %v2572, 0.0
  %vm2623 = vcmp.gt.f32.partialorder %v2577, 0.0
  %vm2624 = vcmp.gt.f32.partialorder %v2582, 0.0
  %vm2625 = vcmp.gt.f32.partialorder %v2587, 0.0
  %vm2626 = vcmp.gt.f32.partialorder %v2592, 0.0
  %vm2627 = vcmp.gt.f32.partialorder %v2597, 0.0
  %vm2628 = vcmp.gt.f32.partialorder %v2602, 0.0
  %vm2629 = vcmp.gt.f32.partialorder %v2607, 0.0
  %vm2630 = vcmp.gt.f32.partialorder %v2612, 0.0
  %v2631 = vmul.f32 %v2537, 0.2
  %v2632 = vmul.f32 %v2542, 0.2
  %v2633 = vmul.f32 %v2547, 0.2
  %v2634 = vmul.f32 %v2552, 0.2
  %v2635 = vmul.f32 %v2557, 0.2
  %v2636 = vmul.f32 %v2562, 0.2
  %v2637 = vmul.f32 %v2567, 0.2
  %v2638 = vmul.f32 %v2572, 0.2
  %v2639 = vmul.f32 %v2577, 0.2
  %v2640 = vmul.f32 %v2582, 0.2
  %v2641 = vmul.f32 %v2587, 0.2
  %v2642 = vmul.f32 %v2592, 0.2
  %v2643 = vmul.f32 %v2597, 0.2
  %v2644 = vmul.f32 %v2602, 0.2
  %v2645 = vmul.f32 %v2607, 0.2
  %v2646 = vmul.f32 %v2612, 0.2
  %v2647 = vsel %vm2615, %v2537, %v2631
  %v2648 = vsel %vm2616, %v2542, %v2632
  %v2649 = vsel %vm2617, %v2547, %v2633
  %v2650 = vsel %vm2618, %v2552, %v2634
  %v2651 = vsel %vm2619, %v2557, %v2635
  %v2652 = vsel %vm2620, %v2562, %v2636
  %v2653 = vsel %vm2621, %v2567, %v2637
  %v2654 = vsel %vm2622, %v2572, %v2638
  %v2655 = vsel %vm2623, %v2577, %v2639
  %v2656 = vsel %vm2624, %v2582, %v2640
  %v2657 = vsel %vm2625, %v2587, %v2641
  %v2658 = vsel %vm2626, %v2592, %v2642
  %v2659 = vsel %vm2627, %v2597, %v2643
  %v2660 = vsel %vm2628, %v2602, %v2644
  %v2661 = vsel %vm2629, %v2607, %v2645
  %v2662 = vsel %vm2630, %v2612, %v2646
  %v2663 = vadd.f32 %v2647, %v39
  %v2664 = vadd.f32 %v2648, %v40
  %v2665 = vadd.f32 %v2649, %v41
  %v2666 = vadd.f32 %v2650, %v42
  %v2667 = vadd.f32 %v2651, %v43
  %v2668 = vadd.f32 %v2652, %v44
  %v2669 = vadd.f32 %v2653, %v45
  %v2670 = vadd.f32 %v2654, %v46
  %v2671 = vadd.f32 %v2655, %v47
  %v2672 = vadd.f32 %v2656, %v48
  %v2673 = vadd.f32 %v2657, %v49
  %v2674 = vadd.f32 %v2658, %v50
  %v2675 = vadd.f32 %v2659, %v51
  %v2676 = vadd.f32 %v2660, %v52
  %v2677 = vadd.f32 %v2661, %v53
  %v2678 = vadd.f32 %v2662, %v54
  %2679 = vmax.xlane.f32.xlu0 %v2663
  %v2680 = vpop.xlane.xlu0 %2679
  %2681 = vmax.xlane.f32.xlu0 %v2664
  %v2682 = vpop.xlane.xlu0 %2681
  %2683 = vmax.xlane.f32.xlu0 %v2665
  %v2684 = vpop.xlane.xlu0 %2683
  %2685 = vmax.xlane.f32.xlu0 %v2666
  %v2686 = vpop.xlane.xlu0 %2685
  %2687 = vmax.xlane.f32.xlu0 %v2667
  %v2688 = vpop.xlane.xlu0 %2687
  %2689 = vmax.xlane.f32.xlu0 %v2668
  %v2690 = vpop.xlane.xlu0 %2689
  %2691 = vmax.xlane.f32.xlu0 %v2669
  %v2692 = vpop.xlane.xlu0 %2691
  %2693 = vmax.xlane.f32.xlu0 %v2670
  %v2694 = vpop.xlane.xlu0 %2693
  %2695 = vmax.xlane.f32.xlu0 %v2671
  %v2696 = vpop.xlane.xlu0 %2695
  %2697 = vmax.xlane.f32.xlu0 %v2672
  %v2698 = vpop.xlane.xlu0 %2697
  %2699 = vmax.xlane.f32.xlu0 %v2673
  %v2700 = vpop.xlane.xlu0 %2699
  %2701 = vmax.xlane.f32.xlu0 %v2674
  %v2702 = vpop.xlane.xlu0 %2701
  %2703 = vmax.xlane.f32.xlu0 %v2675
  %v2704 = vpop.xlane.xlu0 %2703
  %2705 = vmax.xlane.f32.xlu0 %v2676
  %v2706 = vpop.xlane.xlu0 %2705
  %2707 = vmax.xlane.f32.xlu0 %v2677
  %v2708 = vpop.xlane.xlu0 %2707
  %2709 = vmax.xlane.f32.xlu0 %v2678
  %v2710 = vpop.xlane.xlu0 %2709
  %v2711 = vsub.f32 %v2663, %v2680
  %v2712 = vsub.f32 %v2664, %v2682
  %v2713 = vsub.f32 %v2665, %v2684
  %v2714 = vsub.f32 %v2666, %v2686
  %v2715 = vsub.f32 %v2667, %v2688
  %v2716 = vsub.f32 %v2668, %v2690
  %v2717 = vsub.f32 %v2669, %v2692
  %v2718 = vsub.f32 %v2670, %v2694
  %v2719 = vsub.f32 %v2671, %v2696
  %v2720 = vsub.f32 %v2672, %v2698
  %v2721 = vsub.f32 %v2673, %v2700
  %v2722 = vsub.f32 %v2674, %v2702
  %v2723 = vsub.f32 %v2675, %v2704
  %v2724 = vsub.f32 %v2676, %v2706
  %v2725 = vsub.f32 %v2677, %v2708
  %v2726 = vsub.f32 %v2678, %v2710
  %v2727 = vmul.f32 %v2711, 1.442695
  %v2728 = vpow.pop %v2727
  %v2729 = vmul.f32 %v2712, 1.442695
  %v2730 = vpow.pop %v2729
  %v2731 = vmul.f32 %v2713, 1.442695
  %v2732 = vpow.pop %v2731
  %v2733 = vmul.f32 %v2714, 1.442695
  %v2734 = vpow.pop %v2733
  %v2735 = vmul.f32 %v2715, 1.442695
  %v2736 = vpow.pop %v2735
  %v2737 = vmul.f32 %v2716, 1.442695
  %v2738 = vpow.pop %v2737
  %v2739 = vmul.f32 %v2717, 1.442695
  %v2740 = vpow.pop %v2739
  %v2741 = vmul.f32 %v2718, 1.442695
  %v2742 = vpow.pop %v2741
  %v2743 = vmul.f32 %v2719, 1.442695
  %v2744 = vpow.pop %v2743
  %v2745 = vmul.f32 %v2720, 1.442695
  %v2746 = vpow.pop %v2745
  %v2747 = vmul.f32 %v2721, 1.442695
  %v2748 = vpow.pop %v2747
  %v2749 = vmul.f32 %v2722, 1.442695
  %v2750 = vpow.pop %v2749
  %v2751 = vmul.f32 %v2723, 1.442695
  %v2752 = vpow.pop %v2751
  %v2753 = vmul.f32 %v2724, 1.442695
  %v2754 = vpow.pop %v2753
  %v2755 = vmul.f32 %v2725, 1.442695
  %v2756 = vpow.pop %v2755
  %v2757 = vmul.f32 %v2726, 1.442695
  %v2758 = vpow.pop %v2757
  %2759 = vadd.xlane.f32.xlu0 %v2728
  %v2760 = vpop.xlane.xlu0 %2759
  %2761 = vadd.xlane.f32.xlu0 %v2730
  %v2762 = vpop.xlane.xlu0 %2761
  %2763 = vadd.xlane.f32.xlu0 %v2732
  %v2764 = vpop.xlane.xlu0 %2763
  %2765 = vadd.xlane.f32.xlu0 %v2734
  %v2766 = vpop.xlane.xlu0 %2765
  %2767 = vadd.xlane.f32.xlu0 %v2736
  %v2768 = vpop.xlane.xlu0 %2767
  %2769 = vadd.xlane.f32.xlu0 %v2738
  %v2770 = vpop.xlane.xlu0 %2769
  %2771 = vadd.xlane.f32.xlu0 %v2740
  %v2772 = vpop.xlane.xlu0 %2771
  %2773 = vadd.xlane.f32.xlu0 %v2742
  %v2774 = vpop.xlane.xlu0 %2773
  %2775 = vadd.xlane.f32.xlu0 %v2744
  %v2776 = vpop.xlane.xlu0 %2775
  %2777 = vadd.xlane.f32.xlu0 %v2746
  %v2778 = vpop.xlane.xlu0 %2777
  %2779 = vadd.xlane.f32.xlu0 %v2748
  %v2780 = vpop.xlane.xlu0 %2779
  %2781 = vadd.xlane.f32.xlu0 %v2750
  %v2782 = vpop.xlane.xlu0 %2781
  %2783 = vadd.xlane.f32.xlu0 %v2752
  %v2784 = vpop.xlane.xlu0 %2783
  %2785 = vadd.xlane.f32.xlu0 %v2754
  %v2786 = vpop.xlane.xlu0 %2785
  %2787 = vadd.xlane.f32.xlu0 %v2756
  %v2788 = vpop.xlane.xlu0 %2787
  %2789 = vadd.xlane.f32.xlu0 %v2758
  %v2790 = vpop.xlane.xlu0 %2789
  %v2791 = vrcp.pop %v2760
  %v2792 = vmul.f32 %v2728, %v2791
  %v2793 = vrcp.pop %v2762
  %v2794 = vmul.f32 %v2730, %v2793
  %v2795 = vrcp.pop %v2764
  %v2796 = vmul.f32 %v2732, %v2795
  %v2797 = vrcp.pop %v2766
  %v2798 = vmul.f32 %v2734, %v2797
  %v2799 = vrcp.pop %v2768
  %v2800 = vmul.f32 %v2736, %v2799
  %v2801 = vrcp.pop %v2770
  %v2802 = vmul.f32 %v2738, %v2801
  %v2803 = vrcp.pop %v2772
  %v2804 = vmul.f32 %v2740, %v2803
  %v2805 = vrcp.pop %v2774
  %v2806 = vmul.f32 %v2742, %v2805
  %v2807 = vrcp.pop %v2776
  %v2808 = vmul.f32 %v2744, %v2807
  %v2809 = vrcp.pop %v2778
  %v2810 = vmul.f32 %v2746, %v2809
  %v2811 = vrcp.pop %v2780
  %v2812 = vmul.f32 %v2748, %v2811
  %v2813 = vrcp.pop %v2782
  %v2814 = vmul.f32 %v2750, %v2813
  %v2815 = vrcp.pop %v2784
  %v2816 = vmul.f32 %v2752, %v2815
  %v2817 = vrcp.pop %v2786
  %v2818 = vmul.f32 %v2754, %v2817
  %v2819 = vrcp.pop %v2788
  %v2820 = vmul.f32 %v2756, %v2819
  %v2821 = vrcp.pop %v2790
  %v2822 = vmul.f32 %v2758, %v2821
  %v2823 = vmul.f32 %v23, 0.5
  %v2824 = vmul.f32 %v24, 0.5
  %v2825 = vmul.f32 %v25, 0.5
  %v2826 = vmul.f32 %v26, 0.5
  %v2827 = vmul.f32 %v27, 0.5
  %v2828 = vmul.f32 %v28, 0.5
  %v2829 = vmul.f32 %v29, 0.5
  %v2830 = vmul.f32 %v30, 0.5
  %v2831 = vmul.f32 %v31, 0.5
  %v2832 = vmul.f32 %v32, 0.5
  %v2833 = vmul.f32 %v33, 0.5
  %v2834 = vmul.f32 %v34, 0.5
  %v2835 = vmul.f32 %v35, 0.5
  %v2836 = vmul.f32 %v36, 0.5
  %v2837 = vmul.f32 %v37, 0.5
  %v2838 = vmul.f32 %v38, 0.5
  %2839 = vmatprep.subr.mxu0 0.0
  %2840 = vmatpush1.msra.mxu0 %v2111
  %2841 = vmatprep.subr.mxu0 0.0
  %2842 = vmatpush1.msra.mxu0 %v2116
  %2843 = vmatprep.subr.mxu0 0.0
  %2844 = vmatpush1.msra.mxu0 %v2121
  %2845 = vmatprep.subr.mxu0 0.0
  %2846 = vmatpush1.msra.mxu0 %v2126
  %2847 = vmatprep.subr.mxu0 0.0
  %2848 = vmatpush1.msra.mxu0 %v2131
  %2849 = vmatprep.subr.mxu0 0.0
  %2850 = vmatpush1.msra.mxu0 %v2136
  %2851 = vmatprep.subr.mxu0 0.0
  %2852 = vmatpush1.msra.mxu0 %v2141
  %2853 = vmatprep.subr.mxu0 0.0
  %2854 = vmatpush1.msra.mxu0 %v2146
  %2855 = vmatprep.subr.mxu0 0.0
  %2856 = vmatpush1.msra.mxu0 %v2151
  %2857 = vmatprep.subr.mxu0 0.0
  %2858 = vmatpush1.msra.mxu0 %v2156
  %2859 = vmatprep.subr.mxu0 0.0
  %2860 = vmatpush1.msra.mxu0 %v2161
  %2861 = vmatprep.subr.mxu0 0.0
  %2862 = vmatpush1.msra.mxu0 %v2166
  %2863 = vmatprep.subr.mxu0 0.0
  %2864 = vmatpush1.msra.mxu0 %v2171
  %2865 = vmatprep.subr.mxu0 0.0
  %2866 = vmatpush1.msra.mxu0 %v2176
  %2867 = vmatprep.subr.mxu0 0.0
  %2868 = vmatpush1.msra.mxu0 %v2181
  %2869 = vmatprep.subr.mxu0 0.0
  %2870 = vmatpush1.msra.mxu0 %v2186
  %2871 = vmatprep.subr.mxu0 0.0
  %2872 = vmatpush1.msra.mxu0 0.0
  %2873 = vmatprep.subr.mxu0 0.0
  %2874 = vmatpush1.msra.mxu0 0.0
  %2875 = vmatprep.subr.mxu0 0.0
  %2876 = vmatpush1.msra.mxu0 0.0
  %2877 = vmatprep.subr.mxu0 0.0
  %2878 = vmatpush1.msra.mxu0 0.0
  %2879 = vmatprep.subr.mxu0 0.0
  %2880 = vmatpush1.msra.mxu0 0.0
  %2881 = vmatprep.subr.mxu0 0.0
  %2882 = vmatpush1.msra.mxu0 0.0
  %2883 = vmatprep.subr.mxu0 0.0
  %2884 = vmatpush1.msra.mxu0 0.0
  %2885 = vmatprep.subr.mxu0 0.0
  %2886 = vmatpush1.msra.mxu0 0.0
  %2887 = vmatprep.subr.mxu0 0.0
  %2888 = vmatpush1.msra.mxu0 0.0
  %2889 = vmatprep.subr.mxu0 0.0
  %2890 = vmatpush1.msra.mxu0 0.0
  %2891 = vmatprep.subr.mxu0 0.0
  %2892 = vmatpush1.msra.mxu0 0.0
  %2893 = vmatprep.subr.mxu0 0.0
  %2894 = vmatpush1.msra.mxu0 0.0
  %2895 = vmatprep.subr.mxu0 0.0
  %2896 = vmatpush1.msra.mxu0 0.0
  %2897 = vmatprep.subr.mxu0 0.0
  %2898 = vmatpush1.msra.mxu0 0.0
  %2899 = vmatprep.subr.mxu0 0.0
  %2900 = vmatpush1.msra.mxu0 0.0
  %2901 = vmatprep.subr.mxu0 0.0
  %2902 = vmatpush1.msra.mxu0 0.0
  %2903 = vmatprep.mubr.f32.mxu0 0.0
  %2904 = vmatmul.mubr.f32.gmra.mrb[0].mxu0 %v2792
  %v2905 = vpop.f32.mrb[0].mxu0
  %v2906 = vadd.f32 %v2823, %v2905
  %v2907 = vpop.f32.mrb[0].mxu0
  %2908 = vmatprep.mubr.f32.mxu0 0.0
  %2909 = vmatmul.mubr.f32.gmra.mrb[0].mxu0 %v2794
  %v2910 = vpop.f32.mrb[0].mxu0
  %v2911 = vadd.f32 %v2824, %v2910
  %v2912 = vpop.f32.mrb[0].mxu0
  %2913 = vmatprep.mubr.f32.mxu0 0.0
  %2914 = vmatmul.mubr.f32.gmra.mrb[0].mxu0 %v2796
  %v2915 = vpop.f32.mrb[0].mxu0
  %v2916 = vadd.f32 %v2825, %v2915
  %v2917 = vpop.f32.mrb[0].mxu0
  %2918 = vmatprep.mubr.f32.mxu0 0.0
  %2919 = vmatmul.mubr.f32.gmra.mrb[0].mxu0 %v2798
  %v2920 = vpop.f32.mrb[0].mxu0
  %v2921 = vadd.f32 %v2826, %v2920
  %v2922 = vpop.f32.mrb[0].mxu0
  %2923 = vmatprep.mubr.f32.mxu0 0.0
  %2924 = vmatmul.mubr.f32.gmra.mrb[0].mxu0 %v2800
  %v2925 = vpop.f32.mrb[0].mxu0
  %v2926 = vadd.f32 %v2827, %v2925
  %v2927 = vpop.f32.mrb[0].mxu0
  %2928 = vmatprep.mubr.f32.mxu0 0.0
  %2929 = vmatmul.mubr.f32.gmra.mrb[0].mxu0 %v2802
  %v2930 = vpop.f32.mrb[0].mxu0
  %v2931 = vadd.f32 %v2828, %v2930
  %v2932 = vpop.f32.mrb[0].mxu0
  %2933 = vmatprep.mubr.f32.mxu0 0.0
  %2934 = vmatmul.mubr.f32.gmra.mrb[0].mxu0 %v2804
  %v2935 = vpop.f32.mrb[0].mxu0
  %v2936 = vadd.f32 %v2829, %v2935
  %v2937 = vpop.f32.mrb[0].mxu0
  %2938 = vmatprep.mubr.f32.mxu0 0.0
  %2939 = vmatmul.mubr.f32.gmra.mrb[0].mxu0 %v2806
  %v2940 = vpop.f32.mrb[0].mxu0
  %v2941 = vadd.f32 %v2830, %v2940
  %v2942 = vpop.f32.mrb[0].mxu0
  %2943 = vmatprep.mubr.f32.mxu0 0.0
  %2944 = vmatmul.mubr.f32.gmra.mrb[0].mxu0 %v2808
  %v2945 = vpop.f32.mrb[0].mxu0
  %v2946 = vadd.f32 %v2831, %v2945
  %v2947 = vpop.f32.mrb[0].mxu0
  %2948 = vmatprep.mubr.f32.mxu0 0.0
  %2949 = vmatmul.mubr.f32.gmra.mrb[0].mxu0 %v2810
  %v2950 = vpop.f32.mrb[0].mxu0
  %v2951 = vadd.f32 %v2832, %v2950
  %v2952 = vpop.f32.mrb[0].mxu0
  %2953 = vmatprep.mubr.f32.mxu0 0.0
  %2954 = vmatmul.mubr.f32.gmra.mrb[0].mxu0 %v2812
  %v2955 = vpop.f32.mrb[0].mxu0
  %v2956 = vadd.f32 %v2833, %v2955
  %v2957 = vpop.f32.mrb[0].mxu0
  %2958 = vmatprep.mubr.f32.mxu0 0.0
  %2959 = vmatmul.mubr.f32.gmra.mrb[0].mxu0 %v2814
  %v2960 = vpop.f32.mrb[0].mxu0
  %v2961 = vadd.f32 %v2834, %v2960
  %v2962 = vpop.f32.mrb[0].mxu0
  %2963 = vmatprep.mubr.f32.mxu0 0.0
  %2964 = vmatmul.mubr.f32.gmra.mrb[0].mxu0 %v2816
  %v2965 = vpop.f32.mrb[0].mxu0
  %v2966 = vadd.f32 %v2835, %v2965
  %v2967 = vpop.f32.mrb[0].mxu0
  %2968 = vmatprep.mubr.f32.mxu0 0.0
  %2969 = vmatmul.mubr.f32.gmra.mrb[0].mxu0 %v2818
  %v2970 = vpop.f32.mrb[0].mxu0
  %v2971 = vadd.f32 %v2836, %v2970
  %v2972 = vpop.f32.mrb[0].mxu0
  %2973 = vmatprep.mubr.f32.mxu0 0.0
  %2974 = vmatmul.mubr.f32.gmra.mrb[0].mxu0 %v2820
  %v2975 = vpop.f32.mrb[0].mxu0
  %v2976 = vadd.f32 %v2837, %v2975
  %v2977 = vpop.f32.mrb[0].mxu0
  %2978 = vmatprep.mubr.f32.mxu0 0.0
  %2979 = vmatmul.mubr.f32.gmra.mrb[0].mxu0 %v2822
  %v2980 = vpop.f32.mrb[0].mxu0
  %v2981 = vadd.f32 %v2838, %v2980
  %v2982 = vpop.f32.mrb[0].mxu0
  %2983 = vdwg.mxu0
  %2984 = vst.msk [vmem:[%s6] sm:$0xff] %vm56, %v2906
  %2985 = vst.msk [vmem:[%s6 + $0x8] sm:$0xff] %vm56, %v2911
  %2986 = vst.msk [vmem:[%s6 + $0x10] sm:$0xff] %vm56, %v2916
  %2987 = vst.msk [vmem:[%s6 + $0x18] sm:$0xff] %vm56, %v2921
  %2988 = vst.msk [vmem:[%s6 + $0x20] sm:$0xff] %vm56, %v2926
  %2989 = vst.msk [vmem:[%s6 + $0x28] sm:$0xff] %vm56, %v2931
  %2990 = vst.msk [vmem:[%s6 + $0x30] sm:$0xff] %vm56, %v2936
  %2991 = vst.msk [vmem:[%s6 + $0x38] sm:$0xff] %vm56, %v2941
  %2992 = vst.msk [vmem:[%s6 + $0x40] sm:$0xff] %vm56, %v2946
  %2993 = vst.msk [vmem:[%s6 + $0x48] sm:$0xff] %vm56, %v2951
  %2994 = vst.msk [vmem:[%s6 + $0x50] sm:$0xff] %vm56, %v2956
  %2995 = vst.msk [vmem:[%s6 + $0x58] sm:$0xff] %vm56, %v2961
  %2996 = vst.msk [vmem:[%s6 + $0x60] sm:$0xff] %vm56, %v2966
  %2997 = vst.msk [vmem:[%s6 + $0x68] sm:$0xff] %vm56, %v2971
  %2998 = vst.msk [vmem:[%s6 + $0x70] sm:$0xff] %vm56, %v2976
  %2999 = vst.msk [vmem:[%s6 + $0x78] sm:$0xff] %vm56, %v2981
  // Predicated region
  $region26: #{gat2_forward.1} parent=0 // pred_check
    _
  $region27: #{gat2_forward.1} parent=0 // pred_check_branch
    %3001 = sbr.rel (0) target = $region29
  $region28: #{gat2_forward.1} parent=0 // pred_region
    _
  $region29: #{gat2_forward.1} parent=0 // pred_fallthru
    _
  // Predicated region
  $region30: #{gat2_forward.1} parent=0 // pred_check
    _
  $region31: #{gat2_forward.1} parent=0 // pred_check_branch
    %3003 = sbr.rel (0) target = $region33
  $region32: #{gat2_forward.1} parent=0 // pred_region
    _
  $region33: #{gat2_forward.1} parent=0 // pred_fallthru
    _

</llo_original>
